<compile_context>
chip_gen: v6e
topology: v6e:2x2x1
jax: 0.10.0
libtpu: 0.0.40
codegen_flags: <defaults>
</compile_context>

<pallas_src>
import math
import functools

import numpy as np
import jax
import jax.numpy as jnp
from jax import lax
from jax.experimental import pallas as pl
from jax.experimental.pallas import tpu as pltpu


# ----------------- filter-matrix construction (deterministic glue) -----------

def _sinc(x):
    return np.where(x != 0, np.sin(np.pi * x) / (np.pi * x), 1.0)


def _lanczos(x, a):
    cond = np.logical_and(-a < x, x < a)
    out = np.where(cond, _sinc(x) * _sinc(x / a), 0.0)
    return out / out.sum()


def _ramp(ratio, width):
    n = math.ceil(width / ratio + 1)
    out = np.arange(n, dtype=np.float64) * ratio
    return np.concatenate([-out[1:][::-1], out])[1:-1]


def _antialias_matrix(src, dst):
    """(src, src) matrix == reflect-pad + 1-D lanczos conv (only when dst < src)."""
    if dst >= src:
        return np.eye(src, dtype=np.float64)
    k = _lanczos(_ramp(dst / src, 2), 2)
    K = k.shape[0]
    pad = (K - 1) // 2
    A = np.zeros((src, src), dtype=np.float64)
    for i in range(src):
        for d in range(K):
            idx = i + d - pad
            # reflect (no edge repeat); loop handles extreme pad/src ratios too
            while idx < 0 or idx > src - 1:
                if idx < 0:
                    idx = -idx
                if idx > src - 1:
                    idx = 2 * (src - 1) - idx
            A[i, idx] += k[d]
    return A


def _cubic1(t, a):
    return ((a + 2) * t - (a + 3)) * t * t + 1


def _cubic2(t, a):
    return ((a * t - 5 * a) * t + 8 * a) * t - 4 * a


def _bicubic_matrix(src, dst):
    """(dst, src) matrix == torch bicubic interp, align_corners=True, a=-0.75."""
    a = -0.75
    B = np.zeros((dst, src), dtype=np.float64)
    scale = (src - 1) / (dst - 1) if dst > 1 else 0.0
    for p in range(dst):
        s_coord = p * scale
        i0 = int(math.floor(s_coord))
        t = s_coord - i0
        coeffs = (_cubic2(t + 1, a), _cubic1(t, a),
                  _cubic1(1 - t, a), _cubic2(2 - t, a))
        for j, c in enumerate(coeffs):
            idx = min(max(i0 - 1 + j, 0), src - 1)   # PyTorch clamps border reads
            B[p, idx] += c
    return B


def _resample_matrices(h, w, dh, dw):
    L = _bicubic_matrix(h, dh) @ _antialias_matrix(h, dh)       # (dh, h)
    R = (_bicubic_matrix(w, dw) @ _antialias_matrix(w, dw)).T   # (w, dw)
    return L.astype(np.float32), R.astype(np.float32)


def _round_up(v, m):
    return ((v + m - 1) // m) * m


def _build_crop_resample_stacks(side_y, side_x, cut_size, cutn, cut_pow, seed):
    """Fold crop + resample of every cutout into fixed-shape padded matrices.

    Returns numpy float32:
      Lstack : (cutn, cut8,  Hp)        out_k = L_k @ img @ R_k  per (n, c) slice
      Rstack : (cutn, Wp,    cut_lane)
    cut8 = round_up(cut_size, 8) (sublane), cut_lane = round_up(cut_size, 128)
    (lane / MXU N dim).  Padded rows/cols are zero, so padded image regions
    contribute nothing and output rows/cols >= cut_size are exactly zero.
    """
    max_size = min(side_x, side_y)
    min_size = min(side_x, side_y, cut_size)
    rng = np.random.RandomState(seed)     # deterministic stand-in for torch RNG

    Hp = _round_up(side_y, 128)
    Wp = _round_up(side_x, 128)
    cut8 = _round_up(cut_size, 8)
    cut_lane = _round_up(cut_size, 128)

    Lstack = np.zeros((cutn, cut8, Hp), np.float32)
    Rstack = np.zeros((cutn, Wp, cut_lane), np.float32)
    for k in range(cutn):
        size = int(rng.rand() ** cut_pow * (max_size - min_size) + min_size)
        offsetx = int(rng.randint(0, side_x - size + 1))
        offsety = int(rng.randint(0, side_y - size + 1))
        L, R = _resample_matrices(size, size, cut_size, cut_size)  # (cut,size),(size,cut)
        Lstack[k, :cut_size, offsety:offsety + size] = L
        Rstack[k, offsetx:offsetx + size, :cut_size] = R
    return Lstack, Rstack


# ----------------------------- Pallas kernel ---------------------------------

def _make_cutouts_kernel(batch, hp, unroll):
    """One grid step = one cutout applied to all B = N*C image slices."""

    def kernel(l_ref, x_ref, r_ref, o_ref, t_ref):
        # l_ref: (1, cut8, Hp)          bf16  per-cutout row map (crop + H resample)
        # x_ref: (B*Hp, Wp)             bf16  image slab, whole-array VMEM resident
        # r_ref: (1, Wp, cut_lane)      bf16  per-cutout col map (crop + W resample)
        # o_ref: (1, B, cut8, cut_lane) f32   lane-dense output block
        # t_ref: (B*Hp, cut_lane)       bf16  scratch: T = X @ R_k for all slices

        # 1) ONE big matmul: R_k pushed to the MXU once, streamed over B*Hp rows.
        t_ref[...] = jnp.dot(
            x_ref[...], r_ref[0], preferred_element_type=jnp.float32
        ).astype(t_ref.dtype)

        l_mat = l_ref[0]                                    # (cut8, Hp), hoisted

        # 2) small per-slice matmul (cut8, Hp) x (Hp, cut_lane), clamp in f32, store.
        def body(b, carry):
            row = pl.multiple_of(b * hp, 128)               # Hp is a 128 multiple
            t_b = t_ref[pl.ds(row, hp), :]                  # (Hp, cut_lane)
            z = jnp.dot(l_mat, t_b, preferred_element_type=jnp.float32)
            z = jnp.clip(z, 0.0, 1.0).astype(o_ref.dtype)
            o_ref[0, pl.ds(b, 1)] = z[None]
            return carry

        lax.fori_loop(0, batch, body, 0, unroll=unroll)

    return kernel


@functools.partial(jax.jit, static_argnames=("cut_size",))
def _cutouts_pallas(x_nc, l_stack, r_stack, *, cut_size):
    """x_nc: (B, H, W) bf16; l_stack: (cutn, cut8, Hp); r_stack: (cutn, Wp, cut_lane)."""
    B, H, W = x_nc.shape
    cutn, cut8, Hp = l_stack.shape
    Wp, cut_lane = r_stack.shape[1], r_stack.shape[2]

    # zero-pad the slab to the 128-padded (Hp, Wp) canvas, flatten rows so the
    # first matmul sees one tall (B*Hp, Wp) LHS (free row-major view).
    xp = jnp.pad(x_nc, ((0, 0), (0, Hp - H), (0, Wp - W))).reshape(B * Hp, Wp)

    flops = 2 * cutn * B * (Hp * Wp * cut_lane + cut8 * Hp * cut_lane)
    bytes_accessed = (2 * B * Hp * Wp                            # slab read (bf16)
                      + 2 * cutn * (cut8 * Hp + Wp * cut_lane)   # L/R reads (bf16)
                      + 4 * cutn * B * cut8 * cut_lane)          # output writes (f32)

    # VMEM budget: single-buffered slab (memory_space=VMEM, no pipelining) +
    # double-buffered L/R/out blocks + bf16 T scratch + small matmul result.
    vmem_need = (2 * B * Hp * Wp
                 + 2 * 2 * cut8 * Hp
                 + 2 * 2 * Wp * cut_lane
                 + 2 * 4 * B * cut8 * cut_lane
                 + 2 * B * Hp * cut_lane
                 + 4 * cut8 * cut_lane)
    try:   # generation-aware ceiling (≈64 MiB on v7x, ≈128 MiB on v5e/v6e)
        phys = int(getattr(pltpu.get_tpu_info(), "vmem_capacity_bytes", 64 * 2**20))
    except Exception:
        phys = 64 * 2**20
    ceiling = max(phys - (8 << 20), 32 << 20)
    vmem_limit = int(min(max(vmem_need + (4 << 20), 32 << 20), ceiling))
    vmem_limit = int(min(max(vmem_limit, vmem_need), phys))   # never clamp below need

    kernel = _make_cutouts_kernel(B, Hp, unroll=bool(B <= 8))

    out = pl.pallas_call(
        kernel,
        out_shape=jax.ShapeDtypeStruct((cutn, B, cut8, cut_lane), jnp.float32),
        grid=(cutn,),
        in_specs=[
            pl.BlockSpec((1, cut8, Hp), lambda k: (k, 0, 0)),
            # whole-array VMEM residency: one copy, not double-buffered
            pl.BlockSpec(memory_space=pltpu.MemorySpace.VMEM),
            pl.BlockSpec((1, Wp, cut_lane), lambda k: (k, 0, 0)),
        ],
        out_specs=pl.BlockSpec((1, B, cut8, cut_lane), lambda k: (k, 0, 0, 0)),
        scratch_shapes=[pltpu.VMEM((B * Hp, cut_lane), jnp.bfloat16)],
        compiler_params=pltpu.CompilerParams(
            dimension_semantics=("parallel",),     # independent per cutout
            vmem_limit_bytes=vmem_limit),
        cost_estimate=pl.CostEstimate(flops=flops, transcendentals=0,
                                      bytes_accessed=bytes_accessed),
    )(l_stack, xp, r_stack)

    # strip the zero padding (padded output rows/cols are exactly zero)
    return out[:, :, :cut_size, :cut_size]


# ----------------------------- module port -----------------------------------

def make_cutouts_orig(x, cut_size, cutn, cut_pow=1.0, seed=0):
    """JAX/Pallas port of MakeCutoutsOrig.forward.

    x: (N, C, H, W) float32.  Returns (cutn * N, C, cut_size, cut_size) float32.
    Cutout geometry is sampled host-side and folded into fixed-shape L/R
    matrices, so every call with the same image size hits one compilation.
    Operands are shipped in bf16 (MXU-native, half the transfer); accumulation
    and the clamp stay in f32 inside the kernel.
    """
    n, c, side_y, side_x = x.shape
    l_np, r_np = _build_crop_resample_stacks(
        side_y, side_x, cut_size, cutn, cut_pow, seed)
    x_nc = jnp.asarray(x, jnp.bfloat16).reshape(n * c, side_y, side_x)
    l_stack = jnp.asarray(l_np, dtype=jnp.bfloat16)
    r_stack = jnp.asarray(r_np, dtype=jnp.bfloat16)
    out = _cutouts_pallas(x_nc, l_stack, r_stack, cut_size=cut_size)  # (cutn, N*C, cut, cut)
    out = out.reshape(cutn, n, c, cut_size, cut_size)
    return out.reshape(cutn * n, c, cut_size, cut_size)


if __name__ == "__main__":
    key = jax.random.PRNGKey(0)
    N, C, H, W = 2, 4, 16, 16
    cut_size, cutn, cut_pow, seed = 8, 4, 1.0, 0

    # values slightly outside [0, 1] so the clamp actually does something
    x = jax.random.uniform(key, (N, C, H, W), jnp.float32, -0.1, 1.1)

    out = make_cutouts_orig(x, cut_size, cutn, cut_pow, seed=seed)
    out = jax.block_until_ready(out)

    assert out.shape == (cutn * N, C, cut_size, cut_size), out.shape
    assert out.dtype == jnp.float32
    assert float(jnp.min(out)) >= 0.0 and float(jnp.max(out)) <= 1.0

    # --- numpy f32 reference check (same folded L/R, plain matmuls + clamp) --
    Ls, Rs = _build_crop_resample_stacks(H, W, cut_size, cutn, cut_pow, seed)
    Hp, Wp = Ls.shape[2], Rs.shape[1]
    x_np = np.asarray(x, np.float32).reshape(N * C, H, W)
    xp_np = np.zeros((N * C, Hp, Wp), np.float32)
    xp_np[:, :H, :W] = x_np
    ref = np.zeros((cutn, N * C, cut_size, cut_size), np.float32)
    for k in range(cutn):
        for b in range(N * C):
            z = Ls[k] @ xp_np[b] @ Rs[k]
            ref[k, b] = np.clip(z[:cut_size, :cut_size], 0.0, 1.0)
    ref = ref.reshape(cutn, N, C, cut_size, cut_size).reshape(
        cutn * N, C, cut_size, cut_size)
    # bf16 operands (f32 accumulation) vs f32 reference -> slightly looser tol
    np.testing.assert_allclose(np.asarray(out), ref, atol=3e-2)

    print("KERNEL_OK")
</pallas_src>

<mosaic_0001>
module attributes {stable_mosaic.version = 11 : i64} {
  func.func @kernel(%arg0: i32, %arg1: memref<1x8x128xbf16, #tpu.memory_space<vmem>>, %arg2: memref<1024x128xbf16, #tpu.memory_space<vmem>>, %arg3: memref<1x128x128xbf16, #tpu.memory_space<vmem>>, %arg4: memref<1x8x8x128xf32, #tpu.memory_space<vmem>>, %arg5: memref<1024x128xbf16, #tpu.memory_space<vmem>>) attributes {dimension_semantics = [#tpu.dimension_semantics<parallel>], iteration_bounds = array<i64: 4>, scalar_prefetch = 0 : i64, scratch_operands = 1 : i64, tpu.core_type = #tpu.core_type<tc>, window_params = [{transform_indices = @transform_0, window_bounds = array<i64: 1, 8, 128>}, {pipeline_mode = #tpu.pipeline_mode<synchronous>, transform_indices = @transform_1, window_bounds = array<i64: 1024, 128>}, {transform_indices = @transform_2, window_bounds = array<i64: 1, 128, 128>}, {transform_indices = @transform_3, window_bounds = array<i64: 1, 8, 8, 128>}]} {
    %c0 = arith.constant 0 : index
    %c0_0 = arith.constant 0 : index
    %0 = vector.load %arg2[%c0, %c0_0] : memref<1024x128xbf16, #tpu.memory_space<vmem>>, vector<1024x128xbf16>
    %c0_1 = arith.constant 0 : index
    %c0_2 = arith.constant 0 : index
    %c0_3 = arith.constant 0 : index
    %1 = vector.load %arg3[%c0_1, %c0_2, %c0_3] : memref<1x128x128xbf16, #tpu.memory_space<vmem>>, vector<1x128x128xbf16>
    %2 = vector.shape_cast %1 : vector<1x128x128xbf16> to vector<128x128xbf16>
    %cst = arith.constant dense<0.000000e+00> : vector<1024x128xf32>
    %3 = tpu.matmul %0, %2, %cst {dimension_numbers = #tpu.dot_dimension_numbers<[1], [0], [0], [1], [0, 0, 1, 1], [], []>} : vector<1024x128xbf16>, vector<128x128xbf16>, vector<1024x128xf32> -> vector<1024x128xf32>
    %4 = arith.truncf %3 : vector<1024x128xf32> to vector<1024x128xbf16>
    %c0_4 = arith.constant 0 : index
    %c0_5 = arith.constant 0 : index
    %5 = vector.load %arg5[%c0_4, %c0_5] : memref<1024x128xbf16, #tpu.memory_space<vmem>>, vector<1024x128xbf16>
    tpu.vector_store %arg5[%c0_4, %c0_5], %4 {strides = array<i32>} : memref<1024x128xbf16, #tpu.memory_space<vmem>>, vector<1024x128xbf16>,
    %c0_6 = arith.constant 0 : index
    %c0_7 = arith.constant 0 : index
    %c0_8 = arith.constant 0 : index
    %6 = vector.load %arg1[%c0_6, %c0_7, %c0_8] : memref<1x8x128xbf16, #tpu.memory_space<vmem>>, vector<1x8x128xbf16>
    %7 = vector.shape_cast %6 : vector<1x8x128xbf16> to vector<8x128xbf16>
    %c0_i32 = arith.constant 0 : i32
    %c128_i32 = arith.constant 128 : i32
    %8 = arith.muli %c0_i32, %c128_i32 : i32
    %9 = tpu.assume_multiple %8, 128 : i32
    %10 = arith.index_cast %9 : i32 to index
    %c0_9 = arith.constant 0 : index
    %11 = vector.load %arg5[%10, %c0_9] : memref<1024x128xbf16, #tpu.memory_space<vmem>>, vector<128x128xbf16>
    %cst_10 = arith.constant dense<0.000000e+00> : vector<8x128xf32>
    %12 = tpu.matmul %7, %11, %cst_10 {dimension_numbers = #tpu.dot_dimension_numbers<[1], [0], [0], [1], [0, 0, 1, 1], [], []>} : vector<8x128xbf16>, vector<128x128xbf16>, vector<8x128xf32> -> vector<8x128xf32>
    %cst_11 = arith.constant 0.000000e+00 : f32
    %cst_12 = arith.constant 1.000000e+00 : f32
    %13 = vector.broadcast %cst_11 : f32 to vector<8x128xf32>
    %14 = arith.maximumf %13, %12 : vector<8x128xf32>
    %15 = vector.broadcast %cst_12 : f32 to vector<8x128xf32>
    %16 = arith.minimumf %15, %14 : vector<8x128xf32>
    %17 = vector.shape_cast %16 : vector<8x128xf32> to vector<1x8x128xf32>
    %c0_13 = arith.constant 0 : index
    %18 = arith.index_cast %c0_i32 : i32 to index
    %c0_14 = arith.constant 0 : index
    %c0_15 = arith.constant 0 : index
    %19 = vector.load %arg4[%c0_13, %18, %c0_14, %c0_15] : memref<1x8x8x128xf32, #tpu.memory_space<vmem>>, vector<1x1x8x128xf32>
    %20 = vector.shape_cast %19 : vector<1x1x8x128xf32> to vector<1x8x128xf32>
    %21 = vector.shape_cast %17 : vector<1x8x128xf32> to vector<1x1x8x128xf32>
    tpu.vector_store %arg4[%c0_13, %18, %c0_14, %c0_15], %21 {strides = array<i32>} : memref<1x8x8x128xf32, #tpu.memory_space<vmem>>, vector<1x1x8x128xf32>,
    %c1_i32 = arith.constant 1 : i32
    %c128_i32_16 = arith.constant 128 : i32
    %22 = arith.muli %c1_i32, %c128_i32_16 : i32
    %23 = tpu.assume_multiple %22, 128 : i32
    %24 = arith.index_cast %23 : i32 to index
    %c0_17 = arith.constant 0 : index
    %25 = vector.load %arg5[%24, %c0_17] : memref<1024x128xbf16, #tpu.memory_space<vmem>>, vector<128x128xbf16>
    %cst_18 = arith.constant dense<0.000000e+00> : vector<8x128xf32>
    %26 = tpu.matmul %7, %25, %cst_18 {dimension_numbers = #tpu.dot_dimension_numbers<[1], [0], [0], [1], [0, 0, 1, 1], [], []>} : vector<8x128xbf16>, vector<128x128xbf16>, vector<8x128xf32> -> vector<8x128xf32>
    %cst_19 = arith.constant 0.000000e+00 : f32
    %cst_20 = arith.constant 1.000000e+00 : f32
    %27 = vector.broadcast %cst_19 : f32 to vector<8x128xf32>
    %28 = arith.maximumf %27, %26 : vector<8x128xf32>
    %29 = vector.broadcast %cst_20 : f32 to vector<8x128xf32>
    %30 = arith.minimumf %29, %28 : vector<8x128xf32>
    %31 = vector.shape_cast %30 : vector<8x128xf32> to vector<1x8x128xf32>
    %c0_21 = arith.constant 0 : index
    %32 = arith.index_cast %c1_i32 : i32 to index
    %c0_22 = arith.constant 0 : index
    %c0_23 = arith.constant 0 : index
    %33 = vector.load %arg4[%c0_21, %32, %c0_22, %c0_23] : memref<1x8x8x128xf32, #tpu.memory_space<vmem>>, vector<1x1x8x128xf32>
    %34 = vector.shape_cast %33 : vector<1x1x8x128xf32> to vector<1x8x128xf32>
    %35 = vector.shape_cast %31 : vector<1x8x128xf32> to vector<1x1x8x128xf32>
    tpu.vector_store %arg4[%c0_21, %32, %c0_22, %c0_23], %35 {strides = array<i32>} : memref<1x8x8x128xf32, #tpu.memory_space<vmem>>, vector<1x1x8x128xf32>,
    %c2_i32 = arith.constant 2 : i32
    %c128_i32_24 = arith.constant 128 : i32
    %36 = arith.muli %c2_i32, %c128_i32_24 : i32
    %37 = tpu.assume_multiple %36, 128 : i32
    %38 = arith.index_cast %37 : i32 to index
    %c0_25 = arith.constant 0 : index
    %39 = vector.load %arg5[%38, %c0_25] : memref<1024x128xbf16, #tpu.memory_space<vmem>>, vector<128x128xbf16>
    %cst_26 = arith.constant dense<0.000000e+00> : vector<8x128xf32>
    %40 = tpu.matmul %7, %39, %cst_26 {dimension_numbers = #tpu.dot_dimension_numbers<[1], [0], [0], [1], [0, 0, 1, 1], [], []>} : vector<8x128xbf16>, vector<128x128xbf16>, vector<8x128xf32> -> vector<8x128xf32>
    %cst_27 = arith.constant 0.000000e+00 : f32
    %cst_28 = arith.constant 1.000000e+00 : f32
    %41 = vector.broadcast %cst_27 : f32 to vector<8x128xf32>
    %42 = arith.maximumf %41, %40 : vector<8x128xf32>
    %43 = vector.broadcast %cst_28 : f32 to vector<8x128xf32>
    %44 = arith.minimumf %43, %42 : vector<8x128xf32>
    %45 = vector.shape_cast %44 : vector<8x128xf32> to vector<1x8x128xf32>
    %c0_29 = arith.constant 0 : index
    %46 = arith.index_cast %c2_i32 : i32 to index
    %c0_30 = arith.constant 0 : index
    %c0_31 = arith.constant 0 : index
    %47 = vector.load %arg4[%c0_29, %46, %c0_30, %c0_31] : memref<1x8x8x128xf32, #tpu.memory_space<vmem>>, vector<1x1x8x128xf32>
    %48 = vector.shape_cast %47 : vector<1x1x8x128xf32> to vector<1x8x128xf32>
    %49 = vector.shape_cast %45 : vector<1x8x128xf32> to vector<1x1x8x128xf32>
    tpu.vector_store %arg4[%c0_29, %46, %c0_30, %c0_31], %49 {strides = array<i32>} : memref<1x8x8x128xf32, #tpu.memory_space<vmem>>, vector<1x1x8x128xf32>,
    %c3_i32 = arith.constant 3 : i32
    %c128_i32_32 = arith.constant 128 : i32
    %50 = arith.muli %c3_i32, %c128_i32_32 : i32
    %51 = tpu.assume_multiple %50, 128 : i32
    %52 = arith.index_cast %51 : i32 to index
    %c0_33 = arith.constant 0 : index
    %53 = vector.load %arg5[%52, %c0_33] : memref<1024x128xbf16, #tpu.memory_space<vmem>>, vector<128x128xbf16>
    %cst_34 = arith.constant dense<0.000000e+00> : vector<8x128xf32>
    %54 = tpu.matmul %7, %53, %cst_34 {dimension_numbers = #tpu.dot_dimension_numbers<[1], [0], [0], [1], [0, 0, 1, 1], [], []>} : vector<8x128xbf16>, vector<128x128xbf16>, vector<8x128xf32> -> vector<8x128xf32>
    %cst_35 = arith.constant 0.000000e+00 : f32
    %cst_36 = arith.constant 1.000000e+00 : f32
    %55 = vector.broadcast %cst_35 : f32 to vector<8x128xf32>
    %56 = arith.maximumf %55, %54 : vector<8x128xf32>
    %57 = vector.broadcast %cst_36 : f32 to vector<8x128xf32>
    %58 = arith.minimumf %57, %56 : vector<8x128xf32>
    %59 = vector.shape_cast %58 : vector<8x128xf32> to vector<1x8x128xf32>
    %c0_37 = arith.constant 0 : index
    %60 = arith.index_cast %c3_i32 : i32 to index
    %c0_38 = arith.constant 0 : index
    %c0_39 = arith.constant 0 : index
    %61 = vector.load %arg4[%c0_37, %60, %c0_38, %c0_39] : memref<1x8x8x128xf32, #tpu.memory_space<vmem>>, vector<1x1x8x128xf32>
    %62 = vector.shape_cast %61 : vector<1x1x8x128xf32> to vector<1x8x128xf32>
    %63 = vector.shape_cast %59 : vector<1x8x128xf32> to vector<1x1x8x128xf32>
    tpu.vector_store %arg4[%c0_37, %60, %c0_38, %c0_39], %63 {strides = array<i32>} : memref<1x8x8x128xf32, #tpu.memory_space<vmem>>, vector<1x1x8x128xf32>,
    %c4_i32 = arith.constant 4 : i32
    %c128_i32_40 = arith.constant 128 : i32
    %64 = arith.muli %c4_i32, %c128_i32_40 : i32
    %65 = tpu.assume_multiple %64, 128 : i32
    %66 = arith.index_cast %65 : i32 to index
    %c0_41 = arith.constant 0 : index
    %67 = vector.load %arg5[%66, %c0_41] : memref<1024x128xbf16, #tpu.memory_space<vmem>>, vector<128x128xbf16>
    %cst_42 = arith.constant dense<0.000000e+00> : vector<8x128xf32>
    %68 = tpu.matmul %7, %67, %cst_42 {dimension_numbers = #tpu.dot_dimension_numbers<[1], [0], [0], [1], [0, 0, 1, 1], [], []>} : vector<8x128xbf16>, vector<128x128xbf16>, vector<8x128xf32> -> vector<8x128xf32>
    %cst_43 = arith.constant 0.000000e+00 : f32
    %cst_44 = arith.constant 1.000000e+00 : f32
    %69 = vector.broadcast %cst_43 : f32 to vector<8x128xf32>
    %70 = arith.maximumf %69, %68 : vector<8x128xf32>
    %71 = vector.broadcast %cst_44 : f32 to vector<8x128xf32>
    %72 = arith.minimumf %71, %70 : vector<8x128xf32>
    %73 = vector.shape_cast %72 : vector<8x128xf32> to vector<1x8x128xf32>
    %c0_45 = arith.constant 0 : index
    %74 = arith.index_cast %c4_i32 : i32 to index
    %c0_46 = arith.constant 0 : index
    %c0_47 = arith.constant 0 : index
    %75 = vector.load %arg4[%c0_45, %74, %c0_46, %c0_47] : memref<1x8x8x128xf32, #tpu.memory_space<vmem>>, vector<1x1x8x128xf32>
    %76 = vector.shape_cast %75 : vector<1x1x8x128xf32> to vector<1x8x128xf32>
    %77 = vector.shape_cast %73 : vector<1x8x128xf32> to vector<1x1x8x128xf32>
    tpu.vector_store %arg4[%c0_45, %74, %c0_46, %c0_47], %77 {strides = array<i32>} : memref<1x8x8x128xf32, #tpu.memory_space<vmem>>, vector<1x1x8x128xf32>,
    %c5_i32 = arith.constant 5 : i32
    %c128_i32_48 = arith.constant 128 : i32
    %78 = arith.muli %c5_i32, %c128_i32_48 : i32
    %79 = tpu.assume_multiple %78, 128 : i32
    %80 = arith.index_cast %79 : i32 to index
    %c0_49 = arith.constant 0 : index
    %81 = vector.load %arg5[%80, %c0_49] : memref<1024x128xbf16, #tpu.memory_space<vmem>>, vector<128x128xbf16>
    %cst_50 = arith.constant dense<0.000000e+00> : vector<8x128xf32>
    %82 = tpu.matmul %7, %81, %cst_50 {dimension_numbers = #tpu.dot_dimension_numbers<[1], [0], [0], [1], [0, 0, 1, 1], [], []>} : vector<8x128xbf16>, vector<128x128xbf16>, vector<8x128xf32> -> vector<8x128xf32>
    %cst_51 = arith.constant 0.000000e+00 : f32
    %cst_52 = arith.constant 1.000000e+00 : f32
    %83 = vector.broadcast %cst_51 : f32 to vector<8x128xf32>
    %84 = arith.maximumf %83, %82 : vector<8x128xf32>
    %85 = vector.broadcast %cst_52 : f32 to vector<8x128xf32>
    %86 = arith.minimumf %85, %84 : vector<8x128xf32>
    %87 = vector.shape_cast %86 : vector<8x128xf32> to vector<1x8x128xf32>
    %c0_53 = arith.constant 0 : index
    %88 = arith.index_cast %c5_i32 : i32 to index
    %c0_54 = arith.constant 0 : index
    %c0_55 = arith.constant 0 : index
    %89 = vector.load %arg4[%c0_53, %88, %c0_54, %c0_55] : memref<1x8x8x128xf32, #tpu.memory_space<vmem>>, vector<1x1x8x128xf32>
    %90 = vector.shape_cast %89 : vector<1x1x8x128xf32> to vector<1x8x128xf32>
    %91 = vector.shape_cast %87 : vector<1x8x128xf32> to vector<1x1x8x128xf32>
    tpu.vector_store %arg4[%c0_53, %88, %c0_54, %c0_55], %91 {strides = array<i32>} : memref<1x8x8x128xf32, #tpu.memory_space<vmem>>, vector<1x1x8x128xf32>,
    %c6_i32 = arith.constant 6 : i32
    %c128_i32_56 = arith.constant 128 : i32
    %92 = arith.muli %c6_i32, %c128_i32_56 : i32
    %93 = tpu.assume_multiple %92, 128 : i32
    %94 = arith.index_cast %93 : i32 to index
    %c0_57 = arith.constant 0 : index
    %95 = vector.load %arg5[%94, %c0_57] : memref<1024x128xbf16, #tpu.memory_space<vmem>>, vector<128x128xbf16>
    %cst_58 = arith.constant dense<0.000000e+00> : vector<8x128xf32>
    %96 = tpu.matmul %7, %95, %cst_58 {dimension_numbers = #tpu.dot_dimension_numbers<[1], [0], [0], [1], [0, 0, 1, 1], [], []>} : vector<8x128xbf16>, vector<128x128xbf16>, vector<8x128xf32> -> vector<8x128xf32>
    %cst_59 = arith.constant 0.000000e+00 : f32
    %cst_60 = arith.constant 1.000000e+00 : f32
    %97 = vector.broadcast %cst_59 : f32 to vector<8x128xf32>
    %98 = arith.maximumf %97, %96 : vector<8x128xf32>
    %99 = vector.broadcast %cst_60 : f32 to vector<8x128xf32>
    %100 = arith.minimumf %99, %98 : vector<8x128xf32>
    %101 = vector.shape_cast %100 : vector<8x128xf32> to vector<1x8x128xf32>
    %c0_61 = arith.constant 0 : index
    %102 = arith.index_cast %c6_i32 : i32 to index
    %c0_62 = arith.constant 0 : index
    %c0_63 = arith.constant 0 : index
    %103 = vector.load %arg4[%c0_61, %102, %c0_62, %c0_63] : memref<1x8x8x128xf32, #tpu.memory_space<vmem>>, vector<1x1x8x128xf32>
    %104 = vector.shape_cast %103 : vector<1x1x8x128xf32> to vector<1x8x128xf32>
    %105 = vector.shape_cast %101 : vector<1x8x128xf32> to vector<1x1x8x128xf32>
    tpu.vector_store %arg4[%c0_61, %102, %c0_62, %c0_63], %105 {strides = array<i32>} : memref<1x8x8x128xf32, #tpu.memory_space<vmem>>, vector<1x1x8x128xf32>,
    %c7_i32 = arith.constant 7 : i32
    %c128_i32_64 = arith.constant 128 : i32
    %106 = arith.muli %c7_i32, %c128_i32_64 : i32
    %107 = tpu.assume_multiple %106, 128 : i32
    %108 = arith.index_cast %107 : i32 to index
    %c0_65 = arith.constant 0 : index
    %109 = vector.load %arg5[%108, %c0_65] : memref<1024x128xbf16, #tpu.memory_space<vmem>>, vector<128x128xbf16>
    %cst_66 = arith.constant dense<0.000000e+00> : vector<8x128xf32>
    %110 = tpu.matmul %7, %109, %cst_66 {dimension_numbers = #tpu.dot_dimension_numbers<[1], [0], [0], [1], [0, 0, 1, 1], [], []>} : vector<8x128xbf16>, vector<128x128xbf16>, vector<8x128xf32> -> vector<8x128xf32>
    %cst_67 = arith.constant 0.000000e+00 : f32
    %cst_68 = arith.constant 1.000000e+00 : f32
    %111 = vector.broadcast %cst_67 : f32 to vector<8x128xf32>
    %112 = arith.maximumf %111, %110 : vector<8x128xf32>
    %113 = vector.broadcast %cst_68 : f32 to vector<8x128xf32>
    %114 = arith.minimumf %113, %112 : vector<8x128xf32>
    %115 = vector.shape_cast %114 : vector<8x128xf32> to vector<1x8x128xf32>
    %c0_69 = arith.constant 0 : index
    %116 = arith.index_cast %c7_i32 : i32 to index
    %c0_70 = arith.constant 0 : index
    %c0_71 = arith.constant 0 : index
    %117 = vector.load %arg4[%c0_69, %116, %c0_70, %c0_71] : memref<1x8x8x128xf32, #tpu.memory_space<vmem>>, vector<1x1x8x128xf32>
    %118 = vector.shape_cast %117 : vector<1x1x8x128xf32> to vector<1x8x128xf32>
    %119 = vector.shape_cast %115 : vector<1x8x128xf32> to vector<1x1x8x128xf32>
    tpu.vector_store %arg4[%c0_69, %116, %c0_70, %c0_71], %119 {strides = array<i32>} : memref<1x8x8x128xf32, #tpu.memory_space<vmem>>, vector<1x1x8x128xf32>,
    %c8_i32 = arith.constant 8 : i32
    return
  }
  func.func @transform_0(%arg0: i32) -> (i32, i32, i32) {
    %c0_i32 = arith.constant 0 : i32
    %c0_i32_0 = arith.constant 0 : i32
    %c0_i32_1 = arith.constant 0 : i32
    return %arg0, %c0_i32, %c0_i32_0 : i32, i32, i32
  }
  func.func @transform_1(%arg0: i32) -> (i32, i32) {
    %c0_i32 = arith.constant 0 : i32
    %c0_i32_0 = arith.constant 0 : i32
    %c0_i32_1 = arith.constant 0 : i32
    return %c0_i32, %c0_i32_0 : i32, i32
  }
  func.func @transform_2(%arg0: i32) -> (i32, i32, i32) {
    %c0_i32 = arith.constant 0 : i32
    %c0_i32_0 = arith.constant 0 : i32
    %c0_i32_1 = arith.constant 0 : i32
    return %arg0, %c0_i32, %c0_i32_0 : i32, i32, i32
  }
  func.func @transform_3(%arg0: i32) -> (i32, i32, i32, i32) {
    %c0_i32 = arith.constant 0 : i32
    %c0_i32_0 = arith.constant 0 : i32
    %c0_i32_1 = arith.constant 0 : i32
    %c0_i32_2 = arith.constant 0 : i32
    return %arg0, %c0_i32, %c0_i32_0, %c0_i32_1 : i32, i32, i32, i32
  }
}

</mosaic_0001>

<llo_original>
// kernel: _cutouts_pallas.1
$region0: #{_cutouts_pallas.1}
  #allocation0 [shape = 'u32[]', space=smem, size = 0x4, offset = 0x4, fixed_abs, tag = 'smem constant byte address 0x4 - core index']
  #allocation1 [shape = 'u32[144,128]{1,0:T(1,128)}', space=vmem, size = 0x12000, scoped, tag = 'internal scratch']
  #allocation2 [shape = 'bf16[1024,128]{1,0:T(8,128)(2,1)}', space=vmem, size = 0x40000, scoped, tag = 'scratch operand']
  %s0 = inlined_call_operand.vmem [shape: bf16[4,8,128], index: 0, kind: input, shape index: {}]
  %s1 = inlined_call_operand.vmem [shape: bf16[1024,128], index: 1, kind: input, shape index: {}]
  %s2 = inlined_call_operand.vmem [shape: bf16[4,128,128], index: 2, kind: input, shape index: {}]
  %s3 = inlined_call_operand.hbm [shape: f32[4,8,8,128], index: 3, kind: output, shape index: {}]
  %s4 = sld [smem:[#allocation0]]
  $region45: #{_cutouts_pallas.1} parent=0
    _
  %s6 = ssub.s32 1, %s4
  %s7 = scalar_select 0, %s6, %s4
  $region1: #{_cutouts_pallas.1} parent=0
    #allocation3 [shape = 'u8[65536]{0}', space=vmem, size = 0x10000, scoped, tag = 'output window, operand 0']
    #allocation4 [shape = 's32[2]{0}', space=sflag, size = 0x8, scoped, tag = 'scoped memory for _cutouts_pallas.1']
    %8 = vsyncpa [#allocation4], 0
    %s9 = scalar_lea.sflag [#allocation4], 1
    %10 = vsyncpa %s9, 0
    loop: start=0, step=1, limit=6
    $region2: #{_cutouts_pallas.1} parent=1 // loop_pre_header
      _
    $region3: #{_cutouts_pallas.1} parent=1 // loop_header
      %s12 = sphi 0, %s16
      %p13 = scmp.ge.s32.totalorder %s12, 6
      %s22 = sphi 0, %s24
      %s25 = sphi 0, %s22
      %s26 = sphi 0, %s25
      %s42 = sphi 0, %s26
      %s46 = sphi 0, %s46
      %s48 = sphi 0, %s46
      %s49 = sphi 0, %s48
      %s63 = sphi 0, %s49
      %s69 = sphi 0, %s71
      %s72 = sphi 0, %s69
      %s73 = sphi 0, %s72
      %s89 = sphi 0, %s73
      %s95 = sphi 0, %s97
      %s98 = sphi 0, %s95
      %s99 = sphi 0, %s98
      %s115 = sphi 0, %s99
    $region4: #{_cutouts_pallas.1} parent=1 // loop_header_branch
      %15 = sbr.rel (%p13) target = $region8
    $region5: #{_cutouts_pallas.1} parent=1 // loop_body
      %s17 = ssub.s32 %s12, 1
      %s18 = ssub.s32 %s12, 2
      %s19 = sadd.s32 %s12, 1
      %s20 = ssub.s32 %s12, %s19
      %p21 = scmp.eq.s32.totalorder %s20, 0
      %s23 = sadd.s32 %s22, 1
      %s24 = scalar_select %p21, %s22, %s23
      %p27 = pneg %p21
      %p28 = scmp.eq.s32.totalorder %s12, 3
      %p29 = por %p27, %p28
      %p30 = scmp.ne.s32.totalorder %s22, %s25
      %p31 = scmp.eq.s32.totalorder %s12, 0
      %p32 = por %p30, %p31
      %p33 = scmp.ne.s32.totalorder %s22, %s25
      %p34 = scmp.eq.s32.totalorder %s17, 3
      %p35 = por %p33, %p34
      %p36 = scmp.ne.s32.totalorder %s25, %s26
      %p37 = scmp.eq.s32.totalorder %s17, 0
      %p38 = por %p36, %p37
      %p39 = scmp.ne.s32.totalorder %s25, %s26
      %p40 = scmp.eq.s32.totalorder %s18, 3
      %p41 = por %p39, %p40
      %p43 = scmp.ne.s32.totalorder %s26, %s42
      %p44 = scmp.eq.s32.totalorder %s18, 0
      %p45 = por %p43, %p44
      %s47 = sadd.s32 %s46, 1
      %p50 = scmp.eq.s32.totalorder %s12, 3
      %p51 = scmp.ne.s32.totalorder %s46, %s48
      %p52 = scmp.eq.s32.totalorder %s12, 0
      %p53 = por %p51, %p52
      %p54 = scmp.ne.s32.totalorder %s46, %s48
      %p55 = scmp.eq.s32.totalorder %s17, 3
      %p56 = por %p54, %p55
      %p57 = scmp.ne.s32.totalorder %s48, %s49
      %p58 = scmp.eq.s32.totalorder %s17, 0
      %p59 = por %p57, %p58
      %p60 = scmp.ne.s32.totalorder %s48, %s49
      %p61 = scmp.eq.s32.totalorder %s18, 3
      %p62 = por %p60, %p61
      %p64 = scmp.ne.s32.totalorder %s49, %s63
      %p65 = scmp.eq.s32.totalorder %s18, 0
      %p66 = por %p64, %p65
      %s67 = ssub.s32 %s12, %s19
      %p68 = scmp.eq.s32.totalorder %s67, 0
      %s70 = sadd.s32 %s69, 1
      %s71 = scalar_select %p68, %s69, %s70
      %p74 = pneg %p68
      %p75 = scmp.eq.s32.totalorder %s12, 3
      %p76 = por %p74, %p75
      %p77 = scmp.ne.s32.totalorder %s69, %s72
      %p78 = scmp.eq.s32.totalorder %s12, 0
      %p79 = por %p77, %p78
      %p80 = scmp.ne.s32.totalorder %s69, %s72
      %p81 = scmp.eq.s32.totalorder %s17, 3
      %p82 = por %p80, %p81
      %p83 = scmp.ne.s32.totalorder %s72, %s73
      %p84 = scmp.eq.s32.totalorder %s17, 0
      %p85 = por %p83, %p84
      %p86 = scmp.ne.s32.totalorder %s72, %s73
      %p87 = scmp.eq.s32.totalorder %s18, 3
      %p88 = por %p86, %p87
      %p90 = scmp.ne.s32.totalorder %s73, %s89
      %p91 = scmp.eq.s32.totalorder %s18, 0
      %p92 = por %p90, %p91
      %s93 = ssub.s32 %s12, %s19
      %p94 = scmp.eq.s32.totalorder %s93, 0
      %s96 = sadd.s32 %s95, 1
      %s97 = scalar_select %p94, %s95, %s96
      %p100 = pneg %p94
      %p101 = scmp.eq.s32.totalorder %s12, 3
      %p102 = por %p100, %p101
      %p103 = scmp.ne.s32.totalorder %s95, %s98
      %p104 = scmp.eq.s32.totalorder %s12, 0
      %p105 = por %p103, %p104
      %p106 = scmp.ne.s32.totalorder %s95, %s98
      %p107 = scmp.eq.s32.totalorder %s17, 3
      %p108 = por %p106, %p107
      %p109 = scmp.ne.s32.totalorder %s98, %s99
      %p110 = scmp.eq.s32.totalorder %s17, 0
      %p111 = por %p109, %p110
      %p112 = scmp.ne.s32.totalorder %s98, %s99
      %p113 = scmp.eq.s32.totalorder %s18, 3
      %p114 = por %p112, %p113
      %p116 = scmp.ne.s32.totalorder %s99, %s115
      %p117 = scmp.eq.s32.totalorder %s18, 0
      %p118 = por %p116, %p117
      %p119 = scmp.le.s32.totalorder 1, %s12
      %p120 = scmp.lt.s32.totalorder %s12, 5
      %p121 = pnand %p119, %p120
      %p122 = pneg %p121
      // Predicated region
      $region9: #{_cutouts_pallas.1} parent=5 // pred_check
        _
      $region10: #{_cutouts_pallas.1} parent=5 // pred_check_branch
        %124 = sbr.rel (%p121) target = $region12
      $region11: #{_cutouts_pallas.1} parent=5 // pred_region
        %s125 = ssub.s32 %s12, 1
        // Predicated region
        $region13: #{_cutouts_pallas.1} parent=11 // pred_check
          %p126 = pneg %p59
        $region14: #{_cutouts_pallas.1} parent=11 // pred_check_branch
          %128 = sbr.rel (%p126) target = $region16
        $region15: #{_cutouts_pallas.1} parent=11 // pred_region
          _
        $region16: #{_cutouts_pallas.1} parent=11 // pred_fallthru
          _
      $region12: #{_cutouts_pallas.1} parent=5 // pred_fallthru
        _
      %p129 = scmp.lt.s32.totalorder %s12, 4
      // Predicated region
      $region17: #{_cutouts_pallas.1} parent=5 // pred_check
        %p130 = pneg %p129
      $region18: #{_cutouts_pallas.1} parent=5 // pred_check_branch
        %132 = sbr.rel (%p130) target = $region20
      $region19: #{_cutouts_pallas.1} parent=5 // pred_region
        // Predicated region
        $region21: #{_cutouts_pallas.1} parent=19 // pred_check
          %p133 = pneg %p32
        $region22: #{_cutouts_pallas.1} parent=19 // pred_check_branch
          %135 = sbr.rel (%p133) target = $region24
        $region23: #{_cutouts_pallas.1} parent=19 // pred_region
          %p136 = scmp.lt.s32.totalorder %s12, 3
          %s137 = scalar_select %p136, %s12, 3
          %s138 = smul.addr %s137, 4
          %s139 = scalar_lea.vmem %s0, %s138
        $region24: #{_cutouts_pallas.1} parent=19 // pred_fallthru
          _
        // Predicated region
        $region25: #{_cutouts_pallas.1} parent=19 // pred_check
          %p140 = pneg %p79
        $region26: #{_cutouts_pallas.1} parent=19 // pred_check_branch
          %142 = sbr.rel (%p140) target = $region28
        $region27: #{_cutouts_pallas.1} parent=19 // pred_region
          %p143 = scmp.lt.s32.totalorder %s12, 3
          %s144 = scalar_select %p143, %s12, 3
          %s145 = smul.addr %s144, 16
          %s146 = smul.addr %s145, 4
          %s147 = scalar_lea.vmem %s2, %s146
        $region28: #{_cutouts_pallas.1} parent=19 // pred_fallthru
          _
      $region20: #{_cutouts_pallas.1} parent=5 // pred_fallthru
        _
      %p148 = scmp.le.s32.totalorder 1, %s12
      %p149 = scmp.lt.s32.totalorder %s12, 5
      %p150 = pnand %p148, %p149
      %p151 = pneg %p150
      // Predicated region
      $region29: #{_cutouts_pallas.1} parent=5 // pred_check
        _
      $region30: #{_cutouts_pallas.1} parent=5 // pred_check_branch
        %153 = sbr.rel (%p150) target = $region32
      $region31: #{_cutouts_pallas.1} parent=5 // pred_region
        %s154 = ssub.s32 %s12, 1
        %p155 = scmp.lt.s32.totalorder %s17, 3
        %s156 = scalar_select %p155, %s17, 3
        %s157 = smul.addr %s156, 4
        %s158 = scalar_lea.vmem %s0, %s157
        %p159 = pneg %p38
        %p160 = pneg %p35
        %p161 = pneg %p59
        %p162 = pneg %p56
        %p163 = scmp.lt.s32.totalorder %s17, 3
        %s164 = scalar_select %p163, %s17, 3
        %s165 = smul.addr %s164, 16
        %s166 = smul.addr %s165, 4
        %s167 = scalar_lea.vmem %s2, %s166
        %p168 = pneg %p85
        %p169 = pneg %p82
        %p170 = pneg %p111
        %p171 = pneg %p108
        %s172 = sand.u32 %s98, 1
        %s173 = scalar_lea.sflag [#allocation4], %s172
        %s174 = sand.u32 %s98, 1
        %s175 = smul.addr %s174, 64
        %s176 = scalar_lea.vmem [#allocation3], %s175
        %p177 = scmp.lt.s32.totalorder %s17, 3
        %s178 = scalar_select %p177, %s17, 3
        %s179 = smul.addr %s178, 4
        %s180 = scalar_lea.vmem %s0, %s179
        %p181 = scmp.lt.s32.totalorder %s17, 3
        %s182 = scalar_select %p181, %s17, 3
        %s183 = smul.addr %s182, 16
        %s184 = smul.addr %s183, 4
        %s185 = scalar_lea.vmem %s2, %s184
        %v187 = vld [vmem:[%s1] sm:$0xf]
        %v188 = vld [vmem:[%s1 + $0x4] sm:$0xf]
        %v189 = vld [vmem:[%s1 + $0x8] sm:$0xf]
        %v190 = vld [vmem:[%s1 + $0xc] sm:$0xf]
        %v191 = vld [vmem:[%s1 + $0x10] sm:$0xf]
        %v192 = vld [vmem:[%s1 + $0x14] sm:$0xf]
        %v193 = vld [vmem:[%s1 + $0x18] sm:$0xf]
        %v194 = vld [vmem:[%s1 + $0x1c] sm:$0xf]
        %v195 = vld [vmem:[%s1 + $0x20] sm:$0xf]
        %v196 = vld [vmem:[%s1 + $0x24] sm:$0xf]
        %v197 = vld [vmem:[%s1 + $0x28] sm:$0xf]
        %v198 = vld [vmem:[%s1 + $0x2c] sm:$0xf]
        %v199 = vld [vmem:[%s1 + $0x30] sm:$0xf]
        %v200 = vld [vmem:[%s1 + $0x34] sm:$0xf]
        %v201 = vld [vmem:[%s1 + $0x38] sm:$0xf]
        %v202 = vld [vmem:[%s1 + $0x3c] sm:$0xf]
        %v203 = vld [vmem:[%s1 + $0x40] sm:$0xf]
        %v204 = vld [vmem:[%s1 + $0x44] sm:$0xf]
        %v205 = vld [vmem:[%s1 + $0x48] sm:$0xf]
        %v206 = vld [vmem:[%s1 + $0x4c] sm:$0xf]
        %v207 = vld [vmem:[%s1 + $0x50] sm:$0xf]
        %v208 = vld [vmem:[%s1 + $0x54] sm:$0xf]
        %v209 = vld [vmem:[%s1 + $0x58] sm:$0xf]
        %v210 = vld [vmem:[%s1 + $0x5c] sm:$0xf]
        %v211 = vld [vmem:[%s1 + $0x60] sm:$0xf]
        %v212 = vld [vmem:[%s1 + $0x64] sm:$0xf]
        %v213 = vld [vmem:[%s1 + $0x68] sm:$0xf]
        %v214 = vld [vmem:[%s1 + $0x6c] sm:$0xf]
        %v215 = vld [vmem:[%s1 + $0x70] sm:$0xf]
        %v216 = vld [vmem:[%s1 + $0x74] sm:$0xf]
        %v217 = vld [vmem:[%s1 + $0x78] sm:$0xf]
        %v218 = vld [vmem:[%s1 + $0x7c] sm:$0xf]
        %v219 = vld [vmem:[%s1 + $0x80] sm:$0xf]
        %v220 = vld [vmem:[%s1 + $0x84] sm:$0xf]
        %v221 = vld [vmem:[%s1 + $0x88] sm:$0xf]
        %v222 = vld [vmem:[%s1 + $0x8c] sm:$0xf]
        %v223 = vld [vmem:[%s1 + $0x90] sm:$0xf]
        %v224 = vld [vmem:[%s1 + $0x94] sm:$0xf]
        %v225 = vld [vmem:[%s1 + $0x98] sm:$0xf]
        %v226 = vld [vmem:[%s1 + $0x9c] sm:$0xf]
        %v227 = vld [vmem:[%s1 + $0xa0] sm:$0xf]
        %v228 = vld [vmem:[%s1 + $0xa4] sm:$0xf]
        %v229 = vld [vmem:[%s1 + $0xa8] sm:$0xf]
        %v230 = vld [vmem:[%s1 + $0xac] sm:$0xf]
        %v231 = vld [vmem:[%s1 + $0xb0] sm:$0xf]
        %v232 = vld [vmem:[%s1 + $0xb4] sm:$0xf]
        %v233 = vld [vmem:[%s1 + $0xb8] sm:$0xf]
        %v234 = vld [vmem:[%s1 + $0xbc] sm:$0xf]
        %v235 = vld [vmem:[%s1 + $0xc0] sm:$0xf]
        %v236 = vld [vmem:[%s1 + $0xc4] sm:$0xf]
        %v237 = vld [vmem:[%s1 + $0xc8] sm:$0xf]
        %v238 = vld [vmem:[%s1 + $0xcc] sm:$0xf]
        %v239 = vld [vmem:[%s1 + $0xd0] sm:$0xf]
        %v240 = vld [vmem:[%s1 + $0xd4] sm:$0xf]
        %v241 = vld [vmem:[%s1 + $0xd8] sm:$0xf]
        %v242 = vld [vmem:[%s1 + $0xdc] sm:$0xf]
        %v243 = vld [vmem:[%s1 + $0xe0] sm:$0xf]
        %v244 = vld [vmem:[%s1 + $0xe4] sm:$0xf]
        %v245 = vld [vmem:[%s1 + $0xe8] sm:$0xf]
        %v246 = vld [vmem:[%s1 + $0xec] sm:$0xf]
        %v247 = vld [vmem:[%s1 + $0xf0] sm:$0xf]
        %v248 = vld [vmem:[%s1 + $0xf4] sm:$0xf]
        %v249 = vld [vmem:[%s1 + $0xf8] sm:$0xf]
        %v250 = vld [vmem:[%s1 + $0xfc] sm:$0xf]
        %v251 = vld [vmem:[%s1 + $0x100] sm:$0xf]
        %v252 = vld [vmem:[%s1 + $0x104] sm:$0xf]
        %v253 = vld [vmem:[%s1 + $0x108] sm:$0xf]
        %v254 = vld [vmem:[%s1 + $0x10c] sm:$0xf]
        %v255 = vld [vmem:[%s1 + $0x110] sm:$0xf]
        %v256 = vld [vmem:[%s1 + $0x114] sm:$0xf]
        %v257 = vld [vmem:[%s1 + $0x118] sm:$0xf]
        %v258 = vld [vmem:[%s1 + $0x11c] sm:$0xf]
        %v259 = vld [vmem:[%s1 + $0x120] sm:$0xf]
        %v260 = vld [vmem:[%s1 + $0x124] sm:$0xf]
        %v261 = vld [vmem:[%s1 + $0x128] sm:$0xf]
        %v262 = vld [vmem:[%s1 + $0x12c] sm:$0xf]
        %v263 = vld [vmem:[%s1 + $0x130] sm:$0xf]
        %v264 = vld [vmem:[%s1 + $0x134] sm:$0xf]
        %v265 = vld [vmem:[%s1 + $0x138] sm:$0xf]
        %v266 = vld [vmem:[%s1 + $0x13c] sm:$0xf]
        %v267 = vld [vmem:[%s1 + $0x140] sm:$0xf]
        %v268 = vld [vmem:[%s1 + $0x144] sm:$0xf]
        %v269 = vld [vmem:[%s1 + $0x148] sm:$0xf]
        %v270 = vld [vmem:[%s1 + $0x14c] sm:$0xf]
        %v271 = vld [vmem:[%s1 + $0x150] sm:$0xf]
        %v272 = vld [vmem:[%s1 + $0x154] sm:$0xf]
        %v273 = vld [vmem:[%s1 + $0x158] sm:$0xf]
        %v274 = vld [vmem:[%s1 + $0x15c] sm:$0xf]
        %v275 = vld [vmem:[%s1 + $0x160] sm:$0xf]
        %v276 = vld [vmem:[%s1 + $0x164] sm:$0xf]
        %v277 = vld [vmem:[%s1 + $0x168] sm:$0xf]
        %v278 = vld [vmem:[%s1 + $0x16c] sm:$0xf]
        %v279 = vld [vmem:[%s1 + $0x170] sm:$0xf]
        %v280 = vld [vmem:[%s1 + $0x174] sm:$0xf]
        %v281 = vld [vmem:[%s1 + $0x178] sm:$0xf]
        %v282 = vld [vmem:[%s1 + $0x17c] sm:$0xf]
        %v283 = vld [vmem:[%s1 + $0x180] sm:$0xf]
        %v284 = vld [vmem:[%s1 + $0x184] sm:$0xf]
        %v285 = vld [vmem:[%s1 + $0x188] sm:$0xf]
        %v286 = vld [vmem:[%s1 + $0x18c] sm:$0xf]
        %v287 = vld [vmem:[%s1 + $0x190] sm:$0xf]
        %v288 = vld [vmem:[%s1 + $0x194] sm:$0xf]
        %v289 = vld [vmem:[%s1 + $0x198] sm:$0xf]
        %v290 = vld [vmem:[%s1 + $0x19c] sm:$0xf]
        %v291 = vld [vmem:[%s1 + $0x1a0] sm:$0xf]
        %v292 = vld [vmem:[%s1 + $0x1a4] sm:$0xf]
        %v293 = vld [vmem:[%s1 + $0x1a8] sm:$0xf]
        %v294 = vld [vmem:[%s1 + $0x1ac] sm:$0xf]
        %v295 = vld [vmem:[%s1 + $0x1b0] sm:$0xf]
        %v296 = vld [vmem:[%s1 + $0x1b4] sm:$0xf]
        %v297 = vld [vmem:[%s1 + $0x1b8] sm:$0xf]
        %v298 = vld [vmem:[%s1 + $0x1bc] sm:$0xf]
        %v299 = vld [vmem:[%s1 + $0x1c0] sm:$0xf]
        %v300 = vld [vmem:[%s1 + $0x1c4] sm:$0xf]
        %v301 = vld [vmem:[%s1 + $0x1c8] sm:$0xf]
        %v302 = vld [vmem:[%s1 + $0x1cc] sm:$0xf]
        %v303 = vld [vmem:[%s1 + $0x1d0] sm:$0xf]
        %v304 = vld [vmem:[%s1 + $0x1d4] sm:$0xf]
        %v305 = vld [vmem:[%s1 + $0x1d8] sm:$0xf]
        %v306 = vld [vmem:[%s1 + $0x1dc] sm:$0xf]
        %v307 = vld [vmem:[%s1 + $0x1e0] sm:$0xf]
        %v308 = vld [vmem:[%s1 + $0x1e4] sm:$0xf]
        %v309 = vld [vmem:[%s1 + $0x1e8] sm:$0xf]
        %v310 = vld [vmem:[%s1 + $0x1ec] sm:$0xf]
        %v311 = vld [vmem:[%s1 + $0x1f0] sm:$0xf]
        %v312 = vld [vmem:[%s1 + $0x1f4] sm:$0xf]
        %v313 = vld [vmem:[%s1 + $0x1f8] sm:$0xf]
        %v314 = vld [vmem:[%s1 + $0x1fc] sm:$0xf]
        %v315 = vld [vmem:[%s185] sm:$0xf]
        %v316 = vld [vmem:[%s185 + $0x4] sm:$0xf]
        %v317 = vld [vmem:[%s185 + $0x8] sm:$0xf]
        %v318 = vld [vmem:[%s185 + $0xc] sm:$0xf]
        %v319 = vld [vmem:[%s185 + $0x10] sm:$0xf]
        %v320 = vld [vmem:[%s185 + $0x14] sm:$0xf]
        %v321 = vld [vmem:[%s185 + $0x18] sm:$0xf]
        %v322 = vld [vmem:[%s185 + $0x1c] sm:$0xf]
        %v323 = vld [vmem:[%s185 + $0x20] sm:$0xf]
        %v324 = vld [vmem:[%s185 + $0x24] sm:$0xf]
        %v325 = vld [vmem:[%s185 + $0x28] sm:$0xf]
        %v326 = vld [vmem:[%s185 + $0x2c] sm:$0xf]
        %v327 = vld [vmem:[%s185 + $0x30] sm:$0xf]
        %v328 = vld [vmem:[%s185 + $0x34] sm:$0xf]
        %v329 = vld [vmem:[%s185 + $0x38] sm:$0xf]
        %v330 = vld [vmem:[%s185 + $0x3c] sm:$0xf]
        %v459 = vunpack.c.l.b16 %v187
        %v460 = vunpack.c.l.b16 %v188
        %v461 = vunpack.c.l.b16 %v189
        %v462 = vunpack.c.l.b16 %v190
        %v463 = vunpack.c.l.b16 %v191
        %v464 = vunpack.c.l.b16 %v192
        %v465 = vunpack.c.l.b16 %v193
        %v466 = vunpack.c.l.b16 %v194
        %v467 = vunpack.c.l.b16 %v195
        %v468 = vunpack.c.l.b16 %v196
        %v469 = vunpack.c.l.b16 %v197
        %v470 = vunpack.c.l.b16 %v198
        %v471 = vunpack.c.l.b16 %v199
        %v472 = vunpack.c.l.b16 %v200
        %v473 = vunpack.c.l.b16 %v201
        %v474 = vunpack.c.l.b16 %v202
        %v475 = vunpack.c.l.b16 %v203
        %v476 = vunpack.c.l.b16 %v204
        %v477 = vunpack.c.l.b16 %v205
        %v478 = vunpack.c.l.b16 %v206
        %v479 = vunpack.c.l.b16 %v207
        %v480 = vunpack.c.l.b16 %v208
        %v481 = vunpack.c.l.b16 %v209
        %v482 = vunpack.c.l.b16 %v210
        %v483 = vunpack.c.l.b16 %v211
        %v484 = vunpack.c.l.b16 %v212
        %v485 = vunpack.c.l.b16 %v213
        %v486 = vunpack.c.l.b16 %v214
        %v487 = vunpack.c.l.b16 %v215
        %v488 = vunpack.c.l.b16 %v216
        %v489 = vunpack.c.l.b16 %v217
        %v490 = vunpack.c.l.b16 %v218
        %v491 = vunpack.c.l.b16 %v219
        %v492 = vunpack.c.l.b16 %v220
        %v493 = vunpack.c.l.b16 %v221
        %v494 = vunpack.c.l.b16 %v222
        %v495 = vunpack.c.l.b16 %v223
        %v496 = vunpack.c.l.b16 %v224
        %v497 = vunpack.c.l.b16 %v225
        %v498 = vunpack.c.l.b16 %v226
        %v499 = vunpack.c.l.b16 %v227
        %v500 = vunpack.c.l.b16 %v228
        %v501 = vunpack.c.l.b16 %v229
        %v502 = vunpack.c.l.b16 %v230
        %v503 = vunpack.c.l.b16 %v231
        %v504 = vunpack.c.l.b16 %v232
        %v505 = vunpack.c.l.b16 %v233
        %v506 = vunpack.c.l.b16 %v234
        %v507 = vunpack.c.l.b16 %v235
        %v508 = vunpack.c.l.b16 %v236
        %v509 = vunpack.c.l.b16 %v237
        %v510 = vunpack.c.l.b16 %v238
        %v511 = vunpack.c.l.b16 %v239
        %v512 = vunpack.c.l.b16 %v240
        %v513 = vunpack.c.l.b16 %v241
        %v514 = vunpack.c.l.b16 %v242
        %v515 = vunpack.c.l.b16 %v243
        %v516 = vunpack.c.l.b16 %v244
        %v517 = vunpack.c.l.b16 %v245
        %v518 = vunpack.c.l.b16 %v246
        %v519 = vunpack.c.l.b16 %v247
        %v520 = vunpack.c.l.b16 %v248
        %v521 = vunpack.c.l.b16 %v249
        %v522 = vunpack.c.l.b16 %v250
        %v523 = vunpack.c.l.b16 %v251
        %v524 = vunpack.c.l.b16 %v252
        %v525 = vunpack.c.l.b16 %v253
        %v526 = vunpack.c.l.b16 %v254
        %v527 = vunpack.c.l.b16 %v255
        %v528 = vunpack.c.l.b16 %v256
        %v529 = vunpack.c.l.b16 %v257
        %v530 = vunpack.c.l.b16 %v258
        %v531 = vunpack.c.l.b16 %v259
        %v532 = vunpack.c.l.b16 %v260
        %v533 = vunpack.c.l.b16 %v261
        %v534 = vunpack.c.l.b16 %v262
        %v535 = vunpack.c.l.b16 %v263
        %v536 = vunpack.c.l.b16 %v264
        %v537 = vunpack.c.l.b16 %v265
        %v538 = vunpack.c.l.b16 %v266
        %v539 = vunpack.c.l.b16 %v267
        %v540 = vunpack.c.l.b16 %v268
        %v541 = vunpack.c.l.b16 %v269
        %v542 = vunpack.c.l.b16 %v270
        %v543 = vunpack.c.l.b16 %v271
        %v544 = vunpack.c.l.b16 %v272
        %v545 = vunpack.c.l.b16 %v273
        %v546 = vunpack.c.l.b16 %v274
        %v547 = vunpack.c.l.b16 %v275
        %v548 = vunpack.c.l.b16 %v276
        %v549 = vunpack.c.l.b16 %v277
        %v550 = vunpack.c.l.b16 %v278
        %v551 = vunpack.c.l.b16 %v279
        %v552 = vunpack.c.l.b16 %v280
        %v553 = vunpack.c.l.b16 %v281
        %v554 = vunpack.c.l.b16 %v282
        %v555 = vunpack.c.l.b16 %v283
        %v556 = vunpack.c.l.b16 %v284
        %v557 = vunpack.c.l.b16 %v285
        %v558 = vunpack.c.l.b16 %v286
        %v559 = vunpack.c.l.b16 %v287
        %v560 = vunpack.c.l.b16 %v288
        %v561 = vunpack.c.l.b16 %v289
        %v562 = vunpack.c.l.b16 %v290
        %v563 = vunpack.c.l.b16 %v291
        %v564 = vunpack.c.l.b16 %v292
        %v565 = vunpack.c.l.b16 %v293
        %v566 = vunpack.c.l.b16 %v294
        %v567 = vunpack.c.l.b16 %v295
        %v568 = vunpack.c.l.b16 %v296
        %v569 = vunpack.c.l.b16 %v297
        %v570 = vunpack.c.l.b16 %v298
        %v571 = vunpack.c.l.b16 %v299
        %v572 = vunpack.c.l.b16 %v300
        %v573 = vunpack.c.l.b16 %v301
        %v574 = vunpack.c.l.b16 %v302
        %v575 = vunpack.c.l.b16 %v303
        %v576 = vunpack.c.l.b16 %v304
        %v577 = vunpack.c.l.b16 %v305
        %v578 = vunpack.c.l.b16 %v306
        %v579 = vunpack.c.l.b16 %v307
        %v580 = vunpack.c.l.b16 %v308
        %v581 = vunpack.c.l.b16 %v309
        %v582 = vunpack.c.l.b16 %v310
        %v583 = vunpack.c.l.b16 %v311
        %v584 = vunpack.c.l.b16 %v312
        %v585 = vunpack.c.l.b16 %v313
        %v586 = vunpack.c.l.b16 %v314
        %v587 = vpack.c.b16 %v460, %v459
        %v588 = vpack.c.b16 %v462, %v461
        %v589 = vpack.c.b16 %v464, %v463
        %v590 = vpack.c.b16 %v466, %v465
        %v591 = vpack.c.b16 %v468, %v467
        %v592 = vpack.c.b16 %v470, %v469
        %v593 = vpack.c.b16 %v472, %v471
        %v594 = vpack.c.b16 %v474, %v473
        %v595 = vpack.c.b16 %v476, %v475
        %v596 = vpack.c.b16 %v478, %v477
        %v597 = vpack.c.b16 %v480, %v479
        %v598 = vpack.c.b16 %v482, %v481
        %v599 = vpack.c.b16 %v484, %v483
        %v600 = vpack.c.b16 %v486, %v485
        %v601 = vpack.c.b16 %v488, %v487
        %v602 = vpack.c.b16 %v490, %v489
        %v603 = vpack.c.b16 %v492, %v491
        %v604 = vpack.c.b16 %v494, %v493
        %v605 = vpack.c.b16 %v496, %v495
        %v606 = vpack.c.b16 %v498, %v497
        %v607 = vpack.c.b16 %v500, %v499
        %v608 = vpack.c.b16 %v502, %v501
        %v609 = vpack.c.b16 %v504, %v503
        %v610 = vpack.c.b16 %v506, %v505
        %v611 = vpack.c.b16 %v508, %v507
        %v612 = vpack.c.b16 %v510, %v509
        %v613 = vpack.c.b16 %v512, %v511
        %v614 = vpack.c.b16 %v514, %v513
        %v615 = vpack.c.b16 %v516, %v515
        %v616 = vpack.c.b16 %v518, %v517
        %v617 = vpack.c.b16 %v520, %v519
        %v618 = vpack.c.b16 %v522, %v521
        %v619 = vpack.c.b16 %v524, %v523
        %v620 = vpack.c.b16 %v526, %v525
        %v621 = vpack.c.b16 %v528, %v527
        %v622 = vpack.c.b16 %v530, %v529
        %v623 = vpack.c.b16 %v532, %v531
        %v624 = vpack.c.b16 %v534, %v533
        %v625 = vpack.c.b16 %v536, %v535
        %v626 = vpack.c.b16 %v538, %v537
        %v627 = vpack.c.b16 %v540, %v539
        %v628 = vpack.c.b16 %v542, %v541
        %v629 = vpack.c.b16 %v544, %v543
        %v630 = vpack.c.b16 %v546, %v545
        %v631 = vpack.c.b16 %v548, %v547
        %v632 = vpack.c.b16 %v550, %v549
        %v633 = vpack.c.b16 %v552, %v551
        %v634 = vpack.c.b16 %v554, %v553
        %v635 = vpack.c.b16 %v556, %v555
        %v636 = vpack.c.b16 %v558, %v557
        %v637 = vpack.c.b16 %v560, %v559
        %v638 = vpack.c.b16 %v562, %v561
        %v639 = vpack.c.b16 %v564, %v563
        %v640 = vpack.c.b16 %v566, %v565
        %v641 = vpack.c.b16 %v568, %v567
        %v642 = vpack.c.b16 %v570, %v569
        %v643 = vpack.c.b16 %v572, %v571
        %v644 = vpack.c.b16 %v574, %v573
        %v645 = vpack.c.b16 %v576, %v575
        %v646 = vpack.c.b16 %v578, %v577
        %v647 = vpack.c.b16 %v580, %v579
        %v648 = vpack.c.b16 %v582, %v581
        %v649 = vpack.c.b16 %v584, %v583
        %v650 = vpack.c.b16 %v586, %v585
        %v731 = vunpack.c.l.b16 %v315
        %v732 = vunpack.c.l.b16 %v316
        %v733 = vunpack.c.l.b16 %v317
        %v734 = vunpack.c.l.b16 %v318
        %v735 = vunpack.c.l.b16 %v319
        %v736 = vunpack.c.l.b16 %v320
        %v737 = vunpack.c.l.b16 %v321
        %v738 = vunpack.c.l.b16 %v322
        %v739 = vunpack.c.l.b16 %v323
        %v740 = vunpack.c.l.b16 %v324
        %v741 = vunpack.c.l.b16 %v325
        %v742 = vunpack.c.l.b16 %v326
        %v743 = vunpack.c.l.b16 %v327
        %v744 = vunpack.c.l.b16 %v328
        %v745 = vunpack.c.l.b16 %v329
        %v746 = vunpack.c.l.b16 %v330
        %v747 = vpack.c.b16 %v732, %v731
        %v748 = vpack.c.b16 %v734, %v733
        %v749 = vpack.c.b16 %v736, %v735
        %v750 = vpack.c.b16 %v738, %v737
        %v751 = vpack.c.b16 %v740, %v739
        %v752 = vpack.c.b16 %v742, %v741
        %v753 = vpack.c.b16 %v744, %v743
        %v754 = vpack.c.b16 %v746, %v745
        %763 = vmatprep.subr.bf16.mxu0 0
        %764 = vmatpush1.bf16.msra.mxu0 %v754
        %765 = vmatprep.subr.bf16.mxu0 0
        %766 = vmatpush1.bf16.msra.mxu0 %v753
        %767 = vmatprep.subr.bf16.mxu0 0
        %768 = vmatpush1.bf16.msra.mxu0 %v752
        %769 = vmatprep.subr.bf16.mxu0 0
        %770 = vmatpush1.bf16.msra.mxu0 %v751
        %771 = vmatprep.subr.bf16.mxu0 0
        %772 = vmatpush1.bf16.msra.mxu0 %v750
        %773 = vmatprep.subr.bf16.mxu0 0
        %774 = vmatpush1.bf16.msra.mxu0 %v749
        %775 = vmatprep.subr.bf16.mxu0 0
        %776 = vmatpush1.bf16.msra.mxu0 %v748
        %777 = vmatprep.subr.bf16.mxu0 0
        %778 = vmatpush1.bf16.msra.mxu0 %v747
        %779 = vmatprep.subr.bf16.mxu0 0
        %780 = vmatpush2.bf16.msra.mxu0 0
        %781 = vmatprep.subr.bf16.mxu0 0
        %782 = vmatpush2.bf16.msra.mxu0 0
        %783 = vmatprep.subr.bf16.mxu0 0
        %784 = vmatpush2.bf16.msra.mxu0 0
        %785 = vmatprep.subr.bf16.mxu0 0
        %786 = vmatpush2.bf16.msra.mxu0 0
        %787 = vmatprep.subr.bf16.mxu0 0
        %788 = vmatpush2.bf16.msra.mxu0 0
        %789 = vmatprep.subr.bf16.mxu0 0
        %790 = vmatpush2.bf16.msra.mxu0 0
        %791 = vmatprep.subr.bf16.mxu0 0
        %792 = vmatpush2.bf16.msra.mxu0 0
        %793 = vmatprep.subr.bf16.mxu0 0
        %794 = vmatpush2.bf16.msra.mxu0 0
        %795 = vmatprep.mubr.bf16.mxu0 0
        %796 = vmatmul.mubr.bf16.gmra.mxu0 %v587
        %v797 = vpop.f32.mrf.mxu0
        %v798 = vadd.f32 0.0, %v797
        %v799 = vpop.f32.mrf.mxu0
        %v800 = vpop.f32.mrf.mxu0
        %v801 = vadd.f32 0.0, %v800
        %v802 = vpop.f32.mrf.mxu0
        %803 = vmatprep.mubr.bf16.mxu0 0
        %804 = vmatmul.mubr.bf16.gmra.mxu0 %v588
        %v805 = vpop.f32.mrf.mxu0
        %v806 = vadd.f32 0.0, %v805
        %v807 = vpop.f32.mrf.mxu0
        %v808 = vpop.f32.mrf.mxu0
        %v809 = vadd.f32 0.0, %v808
        %v810 = vpop.f32.mrf.mxu0
        %811 = vmatprep.mubr.bf16.mxu0 0
        %812 = vmatmul.mubr.bf16.gmra.mxu0 %v589
        %v813 = vpop.f32.mrf.mxu0
        %v814 = vadd.f32 0.0, %v813
        %v815 = vpop.f32.mrf.mxu0
        %v816 = vpop.f32.mrf.mxu0
        %v817 = vadd.f32 0.0, %v816
        %v818 = vpop.f32.mrf.mxu0
        %819 = vmatprep.mubr.bf16.mxu0 0
        %820 = vmatmul.mubr.bf16.gmra.mxu0 %v590
        %v821 = vpop.f32.mrf.mxu0
        %v822 = vadd.f32 0.0, %v821
        %v823 = vpop.f32.mrf.mxu0
        %v824 = vpop.f32.mrf.mxu0
        %v825 = vadd.f32 0.0, %v824
        %v826 = vpop.f32.mrf.mxu0
        %827 = vmatprep.mubr.bf16.mxu0 0
        %828 = vmatmul.mubr.bf16.gmra.mxu0 %v591
        %v829 = vpop.f32.mrf.mxu0
        %v830 = vadd.f32 0.0, %v829
        %v831 = vpop.f32.mrf.mxu0
        %v832 = vpop.f32.mrf.mxu0
        %v833 = vadd.f32 0.0, %v832
        %v834 = vpop.f32.mrf.mxu0
        %835 = vmatprep.mubr.bf16.mxu0 0
        %836 = vmatmul.mubr.bf16.gmra.mxu0 %v592
        %v837 = vpop.f32.mrf.mxu0
        %v838 = vadd.f32 0.0, %v837
        %v839 = vpop.f32.mrf.mxu0
        %v840 = vpop.f32.mrf.mxu0
        %v841 = vadd.f32 0.0, %v840
        %v842 = vpop.f32.mrf.mxu0
        %843 = vmatprep.mubr.bf16.mxu0 0
        %844 = vmatmul.mubr.bf16.gmra.mxu0 %v593
        %v845 = vpop.f32.mrf.mxu0
        %v846 = vadd.f32 0.0, %v845
        %v847 = vpop.f32.mrf.mxu0
        %v848 = vpop.f32.mrf.mxu0
        %v849 = vadd.f32 0.0, %v848
        %v850 = vpop.f32.mrf.mxu0
        %851 = vmatprep.mubr.bf16.mxu0 0
        %852 = vmatmul.mubr.bf16.gmra.mxu0 %v594
        %v853 = vpop.f32.mrf.mxu0
        %v854 = vadd.f32 0.0, %v853
        %v855 = vpop.f32.mrf.mxu0
        %v856 = vpop.f32.mrf.mxu0
        %v857 = vadd.f32 0.0, %v856
        %v858 = vpop.f32.mrf.mxu0
        %859 = vmatprep.mubr.bf16.mxu0 0
        %860 = vmatmul.mubr.bf16.gmra.mxu0 %v595
        %v861 = vpop.f32.mrf.mxu0
        %v862 = vadd.f32 0.0, %v861
        %v863 = vpop.f32.mrf.mxu0
        %v864 = vpop.f32.mrf.mxu0
        %v865 = vadd.f32 0.0, %v864
        %v866 = vpop.f32.mrf.mxu0
        %867 = vmatprep.mubr.bf16.mxu0 0
        %868 = vmatmul.mubr.bf16.gmra.mxu0 %v596
        %v869 = vpop.f32.mrf.mxu0
        %v870 = vadd.f32 0.0, %v869
        %v871 = vpop.f32.mrf.mxu0
        %v872 = vpop.f32.mrf.mxu0
        %v873 = vadd.f32 0.0, %v872
        %v874 = vpop.f32.mrf.mxu0
        %875 = vmatprep.mubr.bf16.mxu0 0
        %876 = vmatmul.mubr.bf16.gmra.mxu0 %v597
        %v877 = vpop.f32.mrf.mxu0
        %v878 = vadd.f32 0.0, %v877
        %v879 = vpop.f32.mrf.mxu0
        %v880 = vpop.f32.mrf.mxu0
        %v881 = vadd.f32 0.0, %v880
        %v882 = vpop.f32.mrf.mxu0
        %883 = vmatprep.mubr.bf16.mxu0 0
        %884 = vmatmul.mubr.bf16.gmra.mxu0 %v598
        %v885 = vpop.f32.mrf.mxu0
        %v886 = vadd.f32 0.0, %v885
        %v887 = vpop.f32.mrf.mxu0
        %v888 = vpop.f32.mrf.mxu0
        %v889 = vadd.f32 0.0, %v888
        %v890 = vpop.f32.mrf.mxu0
        %891 = vmatprep.mubr.bf16.mxu0 0
        %892 = vmatmul.mubr.bf16.gmra.mxu0 %v599
        %v893 = vpop.f32.mrf.mxu0
        %v894 = vadd.f32 0.0, %v893
        %v895 = vpop.f32.mrf.mxu0
        %v896 = vpop.f32.mrf.mxu0
        %v897 = vadd.f32 0.0, %v896
        %v898 = vpop.f32.mrf.mxu0
        %899 = vmatprep.mubr.bf16.mxu0 0
        %900 = vmatmul.mubr.bf16.gmra.mxu0 %v600
        %v901 = vpop.f32.mrf.mxu0
        %v902 = vadd.f32 0.0, %v901
        %v903 = vpop.f32.mrf.mxu0
        %v904 = vpop.f32.mrf.mxu0
        %v905 = vadd.f32 0.0, %v904
        %v906 = vpop.f32.mrf.mxu0
        %907 = vmatprep.mubr.bf16.mxu0 0
        %908 = vmatmul.mubr.bf16.gmra.mxu0 %v601
        %v909 = vpop.f32.mrf.mxu0
        %v910 = vadd.f32 0.0, %v909
        %v911 = vpop.f32.mrf.mxu0
        %v912 = vpop.f32.mrf.mxu0
        %v913 = vadd.f32 0.0, %v912
        %v914 = vpop.f32.mrf.mxu0
        %915 = vmatprep.mubr.bf16.mxu0 0
        %916 = vmatmul.mubr.bf16.gmra.mxu0 %v602
        %v917 = vpop.f32.mrf.mxu0
        %v918 = vadd.f32 0.0, %v917
        %v919 = vpop.f32.mrf.mxu0
        %v920 = vpop.f32.mrf.mxu0
        %v921 = vadd.f32 0.0, %v920
        %v922 = vpop.f32.mrf.mxu0
        %923 = vmatprep.mubr.bf16.mxu0 0
        %924 = vmatmul.mubr.bf16.gmra.mxu0 %v603
        %v925 = vpop.f32.mrf.mxu0
        %v926 = vadd.f32 0.0, %v925
        %v927 = vpop.f32.mrf.mxu0
        %v928 = vpop.f32.mrf.mxu0
        %v929 = vadd.f32 0.0, %v928
        %v930 = vpop.f32.mrf.mxu0
        %931 = vmatprep.mubr.bf16.mxu0 0
        %932 = vmatmul.mubr.bf16.gmra.mxu0 %v604
        %v933 = vpop.f32.mrf.mxu0
        %v934 = vadd.f32 0.0, %v933
        %v935 = vpop.f32.mrf.mxu0
        %v936 = vpop.f32.mrf.mxu0
        %v937 = vadd.f32 0.0, %v936
        %v938 = vpop.f32.mrf.mxu0
        %939 = vmatprep.mubr.bf16.mxu0 0
        %940 = vmatmul.mubr.bf16.gmra.mxu0 %v605
        %v941 = vpop.f32.mrf.mxu0
        %v942 = vadd.f32 0.0, %v941
        %v943 = vpop.f32.mrf.mxu0
        %v944 = vpop.f32.mrf.mxu0
        %v945 = vadd.f32 0.0, %v944
        %v946 = vpop.f32.mrf.mxu0
        %947 = vmatprep.mubr.bf16.mxu0 0
        %948 = vmatmul.mubr.bf16.gmra.mxu0 %v606
        %v949 = vpop.f32.mrf.mxu0
        %v950 = vadd.f32 0.0, %v949
        %v951 = vpop.f32.mrf.mxu0
        %v952 = vpop.f32.mrf.mxu0
        %v953 = vadd.f32 0.0, %v952
        %v954 = vpop.f32.mrf.mxu0
        %955 = vmatprep.mubr.bf16.mxu0 0
        %956 = vmatmul.mubr.bf16.gmra.mxu0 %v607
        %v957 = vpop.f32.mrf.mxu0
        %v958 = vadd.f32 0.0, %v957
        %v959 = vpop.f32.mrf.mxu0
        %v960 = vpop.f32.mrf.mxu0
        %v961 = vadd.f32 0.0, %v960
        %v962 = vpop.f32.mrf.mxu0
        %963 = vmatprep.mubr.bf16.mxu0 0
        %964 = vmatmul.mubr.bf16.gmra.mxu0 %v608
        %v965 = vpop.f32.mrf.mxu0
        %v966 = vadd.f32 0.0, %v965
        %v967 = vpop.f32.mrf.mxu0
        %v968 = vpop.f32.mrf.mxu0
        %v969 = vadd.f32 0.0, %v968
        %v970 = vpop.f32.mrf.mxu0
        %971 = vmatprep.mubr.bf16.mxu0 0
        %972 = vmatmul.mubr.bf16.gmra.mxu0 %v609
        %v973 = vpop.f32.mrf.mxu0
        %v974 = vadd.f32 0.0, %v973
        %v975 = vpop.f32.mrf.mxu0
        %v976 = vpop.f32.mrf.mxu0
        %v977 = vadd.f32 0.0, %v976
        %v978 = vpop.f32.mrf.mxu0
        %979 = vmatprep.mubr.bf16.mxu0 0
        %980 = vmatmul.mubr.bf16.gmra.mxu0 %v610
        %v981 = vpop.f32.mrf.mxu0
        %v982 = vadd.f32 0.0, %v981
        %v983 = vpop.f32.mrf.mxu0
        %v984 = vpop.f32.mrf.mxu0
        %v985 = vadd.f32 0.0, %v984
        %v986 = vpop.f32.mrf.mxu0
        %987 = vmatprep.mubr.bf16.mxu0 0
        %988 = vmatmul.mubr.bf16.gmra.mxu0 %v611
        %v989 = vpop.f32.mrf.mxu0
        %v990 = vadd.f32 0.0, %v989
        %v991 = vpop.f32.mrf.mxu0
        %v992 = vpop.f32.mrf.mxu0
        %v993 = vadd.f32 0.0, %v992
        %v994 = vpop.f32.mrf.mxu0
        %995 = vmatprep.mubr.bf16.mxu0 0
        %996 = vmatmul.mubr.bf16.gmra.mxu0 %v612
        %v997 = vpop.f32.mrf.mxu0
        %v998 = vadd.f32 0.0, %v997
        %v999 = vpop.f32.mrf.mxu0
        %v1000 = vpop.f32.mrf.mxu0
        %v1001 = vadd.f32 0.0, %v1000
        %v1002 = vpop.f32.mrf.mxu0
        %1003 = vmatprep.mubr.bf16.mxu0 0
        %1004 = vmatmul.mubr.bf16.gmra.mxu0 %v613
        %v1005 = vpop.f32.mrf.mxu0
        %v1006 = vadd.f32 0.0, %v1005
        %v1007 = vpop.f32.mrf.mxu0
        %v1008 = vpop.f32.mrf.mxu0
        %v1009 = vadd.f32 0.0, %v1008
        %v1010 = vpop.f32.mrf.mxu0
        %1011 = vmatprep.mubr.bf16.mxu0 0
        %1012 = vmatmul.mubr.bf16.gmra.mxu0 %v614
        %v1013 = vpop.f32.mrf.mxu0
        %v1014 = vadd.f32 0.0, %v1013
        %v1015 = vpop.f32.mrf.mxu0
        %v1016 = vpop.f32.mrf.mxu0
        %v1017 = vadd.f32 0.0, %v1016
        %v1018 = vpop.f32.mrf.mxu0
        %1019 = vmatprep.mubr.bf16.mxu0 0
        %1020 = vmatmul.mubr.bf16.gmra.mxu0 %v615
        %v1021 = vpop.f32.mrf.mxu0
        %v1022 = vadd.f32 0.0, %v1021
        %v1023 = vpop.f32.mrf.mxu0
        %v1024 = vpop.f32.mrf.mxu0
        %v1025 = vadd.f32 0.0, %v1024
        %v1026 = vpop.f32.mrf.mxu0
        %1027 = vmatprep.mubr.bf16.mxu0 0
        %1028 = vmatmul.mubr.bf16.gmra.mxu0 %v616
        %v1029 = vpop.f32.mrf.mxu0
        %v1030 = vadd.f32 0.0, %v1029
        %v1031 = vpop.f32.mrf.mxu0
        %v1032 = vpop.f32.mrf.mxu0
        %v1033 = vadd.f32 0.0, %v1032
        %v1034 = vpop.f32.mrf.mxu0
        %1035 = vmatprep.mubr.bf16.mxu0 0
        %1036 = vmatmul.mubr.bf16.gmra.mxu0 %v617
        %v1037 = vpop.f32.mrf.mxu0
        %v1038 = vadd.f32 0.0, %v1037
        %v1039 = vpop.f32.mrf.mxu0
        %v1040 = vpop.f32.mrf.mxu0
        %v1041 = vadd.f32 0.0, %v1040
        %v1042 = vpop.f32.mrf.mxu0
        %1043 = vmatprep.mubr.bf16.mxu0 0
        %1044 = vmatmul.mubr.bf16.gmra.mxu0 %v618
        %v1045 = vpop.f32.mrf.mxu0
        %v1046 = vadd.f32 0.0, %v1045
        %v1047 = vpop.f32.mrf.mxu0
        %v1048 = vpop.f32.mrf.mxu0
        %v1049 = vadd.f32 0.0, %v1048
        %v1050 = vpop.f32.mrf.mxu0
        %1051 = vmatprep.mubr.bf16.mxu0 0
        %1052 = vmatmul.mubr.bf16.gmra.mxu0 %v619
        %v1053 = vpop.f32.mrf.mxu0
        %v1054 = vadd.f32 0.0, %v1053
        %v1055 = vpop.f32.mrf.mxu0
        %v1056 = vpop.f32.mrf.mxu0
        %v1057 = vadd.f32 0.0, %v1056
        %v1058 = vpop.f32.mrf.mxu0
        %1059 = vmatprep.mubr.bf16.mxu0 0
        %1060 = vmatmul.mubr.bf16.gmra.mxu0 %v620
        %v1061 = vpop.f32.mrf.mxu0
        %v1062 = vadd.f32 0.0, %v1061
        %v1063 = vpop.f32.mrf.mxu0
        %v1064 = vpop.f32.mrf.mxu0
        %v1065 = vadd.f32 0.0, %v1064
        %v1066 = vpop.f32.mrf.mxu0
        %1067 = vmatprep.mubr.bf16.mxu0 0
        %1068 = vmatmul.mubr.bf16.gmra.mxu0 %v621
        %v1069 = vpop.f32.mrf.mxu0
        %v1070 = vadd.f32 0.0, %v1069
        %v1071 = vpop.f32.mrf.mxu0
        %v1072 = vpop.f32.mrf.mxu0
        %v1073 = vadd.f32 0.0, %v1072
        %v1074 = vpop.f32.mrf.mxu0
        %1075 = vmatprep.mubr.bf16.mxu0 0
        %1076 = vmatmul.mubr.bf16.gmra.mxu0 %v622
        %v1077 = vpop.f32.mrf.mxu0
        %v1078 = vadd.f32 0.0, %v1077
        %v1079 = vpop.f32.mrf.mxu0
        %v1080 = vpop.f32.mrf.mxu0
        %v1081 = vadd.f32 0.0, %v1080
        %v1082 = vpop.f32.mrf.mxu0
        %1083 = vmatprep.mubr.bf16.mxu0 0
        %1084 = vmatmul.mubr.bf16.gmra.mxu0 %v623
        %v1085 = vpop.f32.mrf.mxu0
        %v1086 = vadd.f32 0.0, %v1085
        %v1087 = vpop.f32.mrf.mxu0
        %v1088 = vpop.f32.mrf.mxu0
        %v1089 = vadd.f32 0.0, %v1088
        %v1090 = vpop.f32.mrf.mxu0
        %1091 = vmatprep.mubr.bf16.mxu0 0
        %1092 = vmatmul.mubr.bf16.gmra.mxu0 %v624
        %v1093 = vpop.f32.mrf.mxu0
        %v1094 = vadd.f32 0.0, %v1093
        %v1095 = vpop.f32.mrf.mxu0
        %v1096 = vpop.f32.mrf.mxu0
        %v1097 = vadd.f32 0.0, %v1096
        %v1098 = vpop.f32.mrf.mxu0
        %1099 = vmatprep.mubr.bf16.mxu0 0
        %1100 = vmatmul.mubr.bf16.gmra.mxu0 %v625
        %v1101 = vpop.f32.mrf.mxu0
        %v1102 = vadd.f32 0.0, %v1101
        %v1103 = vpop.f32.mrf.mxu0
        %v1104 = vpop.f32.mrf.mxu0
        %v1105 = vadd.f32 0.0, %v1104
        %v1106 = vpop.f32.mrf.mxu0
        %1107 = vmatprep.mubr.bf16.mxu0 0
        %1108 = vmatmul.mubr.bf16.gmra.mxu0 %v626
        %v1109 = vpop.f32.mrf.mxu0
        %v1110 = vadd.f32 0.0, %v1109
        %v1111 = vpop.f32.mrf.mxu0
        %v1112 = vpop.f32.mrf.mxu0
        %v1113 = vadd.f32 0.0, %v1112
        %v1114 = vpop.f32.mrf.mxu0
        %1115 = vmatprep.mubr.bf16.mxu0 0
        %1116 = vmatmul.mubr.bf16.gmra.mxu0 %v627
        %v1117 = vpop.f32.mrf.mxu0
        %v1118 = vadd.f32 0.0, %v1117
        %v1119 = vpop.f32.mrf.mxu0
        %v1120 = vpop.f32.mrf.mxu0
        %v1121 = vadd.f32 0.0, %v1120
        %v1122 = vpop.f32.mrf.mxu0
        %1123 = vmatprep.mubr.bf16.mxu0 0
        %1124 = vmatmul.mubr.bf16.gmra.mxu0 %v628
        %v1125 = vpop.f32.mrf.mxu0
        %v1126 = vadd.f32 0.0, %v1125
        %v1127 = vpop.f32.mrf.mxu0
        %v1128 = vpop.f32.mrf.mxu0
        %v1129 = vadd.f32 0.0, %v1128
        %v1130 = vpop.f32.mrf.mxu0
        %1131 = vmatprep.mubr.bf16.mxu0 0
        %1132 = vmatmul.mubr.bf16.gmra.mxu0 %v629
        %v1133 = vpop.f32.mrf.mxu0
        %v1134 = vadd.f32 0.0, %v1133
        %v1135 = vpop.f32.mrf.mxu0
        %v1136 = vpop.f32.mrf.mxu0
        %v1137 = vadd.f32 0.0, %v1136
        %v1138 = vpop.f32.mrf.mxu0
        %1139 = vmatprep.mubr.bf16.mxu0 0
        %1140 = vmatmul.mubr.bf16.gmra.mxu0 %v630
        %v1141 = vpop.f32.mrf.mxu0
        %v1142 = vadd.f32 0.0, %v1141
        %v1143 = vpop.f32.mrf.mxu0
        %v1144 = vpop.f32.mrf.mxu0
        %v1145 = vadd.f32 0.0, %v1144
        %v1146 = vpop.f32.mrf.mxu0
        %1147 = vmatprep.mubr.bf16.mxu0 0
        %1148 = vmatmul.mubr.bf16.gmra.mxu0 %v631
        %v1149 = vpop.f32.mrf.mxu0
        %v1150 = vadd.f32 0.0, %v1149
        %v1151 = vpop.f32.mrf.mxu0
        %v1152 = vpop.f32.mrf.mxu0
        %v1153 = vadd.f32 0.0, %v1152
        %v1154 = vpop.f32.mrf.mxu0
        %1155 = vmatprep.mubr.bf16.mxu0 0
        %1156 = vmatmul.mubr.bf16.gmra.mxu0 %v632
        %v1157 = vpop.f32.mrf.mxu0
        %v1158 = vadd.f32 0.0, %v1157
        %v1159 = vpop.f32.mrf.mxu0
        %v1160 = vpop.f32.mrf.mxu0
        %v1161 = vadd.f32 0.0, %v1160
        %v1162 = vpop.f32.mrf.mxu0
        %1163 = vmatprep.mubr.bf16.mxu0 0
        %1164 = vmatmul.mubr.bf16.gmra.mxu0 %v633
        %v1165 = vpop.f32.mrf.mxu0
        %v1166 = vadd.f32 0.0, %v1165
        %v1167 = vpop.f32.mrf.mxu0
        %v1168 = vpop.f32.mrf.mxu0
        %v1169 = vadd.f32 0.0, %v1168
        %v1170 = vpop.f32.mrf.mxu0
        %1171 = vmatprep.mubr.bf16.mxu0 0
        %1172 = vmatmul.mubr.bf16.gmra.mxu0 %v634
        %v1173 = vpop.f32.mrf.mxu0
        %v1174 = vadd.f32 0.0, %v1173
        %v1175 = vpop.f32.mrf.mxu0
        %v1176 = vpop.f32.mrf.mxu0
        %v1177 = vadd.f32 0.0, %v1176
        %v1178 = vpop.f32.mrf.mxu0
        %1179 = vmatprep.mubr.bf16.mxu0 0
        %1180 = vmatmul.mubr.bf16.gmra.mxu0 %v635
        %v1181 = vpop.f32.mrf.mxu0
        %v1182 = vadd.f32 0.0, %v1181
        %v1183 = vpop.f32.mrf.mxu0
        %v1184 = vpop.f32.mrf.mxu0
        %v1185 = vadd.f32 0.0, %v1184
        %v1186 = vpop.f32.mrf.mxu0
        %1187 = vmatprep.mubr.bf16.mxu0 0
        %1188 = vmatmul.mubr.bf16.gmra.mxu0 %v636
        %v1189 = vpop.f32.mrf.mxu0
        %v1190 = vadd.f32 0.0, %v1189
        %v1191 = vpop.f32.mrf.mxu0
        %v1192 = vpop.f32.mrf.mxu0
        %v1193 = vadd.f32 0.0, %v1192
        %v1194 = vpop.f32.mrf.mxu0
        %1195 = vmatprep.mubr.bf16.mxu0 0
        %1196 = vmatmul.mubr.bf16.gmra.mxu0 %v637
        %v1197 = vpop.f32.mrf.mxu0
        %v1198 = vadd.f32 0.0, %v1197
        %v1199 = vpop.f32.mrf.mxu0
        %v1200 = vpop.f32.mrf.mxu0
        %v1201 = vadd.f32 0.0, %v1200
        %v1202 = vpop.f32.mrf.mxu0
        %1203 = vmatprep.mubr.bf16.mxu0 0
        %1204 = vmatmul.mubr.bf16.gmra.mxu0 %v638
        %v1205 = vpop.f32.mrf.mxu0
        %v1206 = vadd.f32 0.0, %v1205
        %v1207 = vpop.f32.mrf.mxu0
        %v1208 = vpop.f32.mrf.mxu0
        %v1209 = vadd.f32 0.0, %v1208
        %v1210 = vpop.f32.mrf.mxu0
        %1211 = vmatprep.mubr.bf16.mxu0 0
        %1212 = vmatmul.mubr.bf16.gmra.mxu0 %v639
        %v1213 = vpop.f32.mrf.mxu0
        %v1214 = vadd.f32 0.0, %v1213
        %v1215 = vpop.f32.mrf.mxu0
        %v1216 = vpop.f32.mrf.mxu0
        %v1217 = vadd.f32 0.0, %v1216
        %v1218 = vpop.f32.mrf.mxu0
        %1219 = vmatprep.mubr.bf16.mxu0 0
        %1220 = vmatmul.mubr.bf16.gmra.mxu0 %v640
        %v1221 = vpop.f32.mrf.mxu0
        %v1222 = vadd.f32 0.0, %v1221
        %v1223 = vpop.f32.mrf.mxu0
        %v1224 = vpop.f32.mrf.mxu0
        %v1225 = vadd.f32 0.0, %v1224
        %v1226 = vpop.f32.mrf.mxu0
        %1227 = vmatprep.mubr.bf16.mxu0 0
        %1228 = vmatmul.mubr.bf16.gmra.mxu0 %v641
        %v1229 = vpop.f32.mrf.mxu0
        %v1230 = vadd.f32 0.0, %v1229
        %v1231 = vpop.f32.mrf.mxu0
        %v1232 = vpop.f32.mrf.mxu0
        %v1233 = vadd.f32 0.0, %v1232
        %v1234 = vpop.f32.mrf.mxu0
        %1235 = vmatprep.mubr.bf16.mxu0 0
        %1236 = vmatmul.mubr.bf16.gmra.mxu0 %v642
        %v1237 = vpop.f32.mrf.mxu0
        %v1238 = vadd.f32 0.0, %v1237
        %v1239 = vpop.f32.mrf.mxu0
        %v1240 = vpop.f32.mrf.mxu0
        %v1241 = vadd.f32 0.0, %v1240
        %v1242 = vpop.f32.mrf.mxu0
        %1243 = vmatprep.mubr.bf16.mxu0 0
        %1244 = vmatmul.mubr.bf16.gmra.mxu0 %v643
        %v1245 = vpop.f32.mrf.mxu0
        %v1246 = vadd.f32 0.0, %v1245
        %v1247 = vpop.f32.mrf.mxu0
        %v1248 = vpop.f32.mrf.mxu0
        %v1249 = vadd.f32 0.0, %v1248
        %v1250 = vpop.f32.mrf.mxu0
        %1251 = vmatprep.mubr.bf16.mxu0 0
        %1252 = vmatmul.mubr.bf16.gmra.mxu0 %v644
        %v1253 = vpop.f32.mrf.mxu0
        %v1254 = vadd.f32 0.0, %v1253
        %v1255 = vpop.f32.mrf.mxu0
        %v1256 = vpop.f32.mrf.mxu0
        %v1257 = vadd.f32 0.0, %v1256
        %v1258 = vpop.f32.mrf.mxu0
        %1259 = vmatprep.mubr.bf16.mxu0 0
        %1260 = vmatmul.mubr.bf16.gmra.mxu0 %v645
        %v1261 = vpop.f32.mrf.mxu0
        %v1262 = vadd.f32 0.0, %v1261
        %v1263 = vpop.f32.mrf.mxu0
        %v1264 = vpop.f32.mrf.mxu0
        %v1265 = vadd.f32 0.0, %v1264
        %v1266 = vpop.f32.mrf.mxu0
        %1267 = vmatprep.mubr.bf16.mxu0 0
        %1268 = vmatmul.mubr.bf16.gmra.mxu0 %v646
        %v1269 = vpop.f32.mrf.mxu0
        %v1270 = vadd.f32 0.0, %v1269
        %v1271 = vpop.f32.mrf.mxu0
        %v1272 = vpop.f32.mrf.mxu0
        %v1273 = vadd.f32 0.0, %v1272
        %v1274 = vpop.f32.mrf.mxu0
        %1275 = vmatprep.mubr.bf16.mxu0 0
        %1276 = vmatmul.mubr.bf16.gmra.mxu0 %v647
        %v1277 = vpop.f32.mrf.mxu0
        %v1278 = vadd.f32 0.0, %v1277
        %v1279 = vpop.f32.mrf.mxu0
        %v1280 = vpop.f32.mrf.mxu0
        %v1281 = vadd.f32 0.0, %v1280
        %v1282 = vpop.f32.mrf.mxu0
        %1283 = vmatprep.mubr.bf16.mxu0 0
        %1284 = vmatmul.mubr.bf16.gmra.mxu0 %v648
        %v1285 = vpop.f32.mrf.mxu0
        %v1286 = vadd.f32 0.0, %v1285
        %v1287 = vpop.f32.mrf.mxu0
        %v1288 = vpop.f32.mrf.mxu0
        %v1289 = vadd.f32 0.0, %v1288
        %v1290 = vpop.f32.mrf.mxu0
        %1291 = vmatprep.mubr.bf16.mxu0 0
        %1292 = vmatmul.mubr.bf16.gmra.mxu0 %v649
        %v1293 = vpop.f32.mrf.mxu0
        %v1294 = vadd.f32 0.0, %v1293
        %v1295 = vpop.f32.mrf.mxu0
        %v1296 = vpop.f32.mrf.mxu0
        %v1297 = vadd.f32 0.0, %v1296
        %v1298 = vpop.f32.mrf.mxu0
        %1299 = vmatprep.mubr.bf16.mxu0 0
        %1300 = vmatmul.mubr.bf16.gmra.mxu0 %v650
        %v1301 = vpop.f32.mrf.mxu0
        %v1302 = vadd.f32 0.0, %v1301
        %v1303 = vpop.f32.mrf.mxu0
        %v1304 = vpop.f32.mrf.mxu0
        %v1305 = vadd.f32 0.0, %v1304
        %v1306 = vpop.f32.mrf.mxu0
        %1307 = vdwg.mxu0
        %v1308 = vpack.c.bf16 %v801, %v798
        %v1309 = vpack.c.bf16 %v809, %v806
        %v1310 = vpack.c.bf16 %v817, %v814
        %v1311 = vpack.c.bf16 %v825, %v822
        %v1312 = vpack.c.bf16 %v833, %v830
        %v1313 = vpack.c.bf16 %v841, %v838
        %v1314 = vpack.c.bf16 %v849, %v846
        %v1315 = vpack.c.bf16 %v857, %v854
        %v1316 = vpack.c.bf16 %v865, %v862
        %v1317 = vpack.c.bf16 %v873, %v870
        %v1318 = vpack.c.bf16 %v881, %v878
        %v1319 = vpack.c.bf16 %v889, %v886
        %v1320 = vpack.c.bf16 %v897, %v894
        %v1321 = vpack.c.bf16 %v905, %v902
        %v1322 = vpack.c.bf16 %v913, %v910
        %v1323 = vpack.c.bf16 %v921, %v918
        %v1324 = vpack.c.bf16 %v929, %v926
        %v1325 = vpack.c.bf16 %v937, %v934
        %v1326 = vpack.c.bf16 %v945, %v942
        %v1327 = vpack.c.bf16 %v953, %v950
        %v1328 = vpack.c.bf16 %v961, %v958
        %v1329 = vpack.c.bf16 %v969, %v966
        %v1330 = vpack.c.bf16 %v977, %v974
        %v1331 = vpack.c.bf16 %v985, %v982
        %v1332 = vpack.c.bf16 %v993, %v990
        %v1333 = vpack.c.bf16 %v1001, %v998
        %v1334 = vpack.c.bf16 %v1009, %v1006
        %v1335 = vpack.c.bf16 %v1017, %v1014
        %v1336 = vpack.c.bf16 %v1025, %v1022
        %v1337 = vpack.c.bf16 %v1033, %v1030
        %v1338 = vpack.c.bf16 %v1041, %v1038
        %v1339 = vpack.c.bf16 %v1049, %v1046
        %v1340 = vpack.c.bf16 %v1057, %v1054
        %v1341 = vpack.c.bf16 %v1065, %v1062
        %v1342 = vpack.c.bf16 %v1073, %v1070
        %v1343 = vpack.c.bf16 %v1081, %v1078
        %v1344 = vpack.c.bf16 %v1089, %v1086
        %v1345 = vpack.c.bf16 %v1097, %v1094
        %v1346 = vpack.c.bf16 %v1105, %v1102
        %v1347 = vpack.c.bf16 %v1113, %v1110
        %v1348 = vpack.c.bf16 %v1121, %v1118
        %v1349 = vpack.c.bf16 %v1129, %v1126
        %v1350 = vpack.c.bf16 %v1137, %v1134
        %v1351 = vpack.c.bf16 %v1145, %v1142
        %v1352 = vpack.c.bf16 %v1153, %v1150
        %v1353 = vpack.c.bf16 %v1161, %v1158
        %v1354 = vpack.c.bf16 %v1169, %v1166
        %v1355 = vpack.c.bf16 %v1177, %v1174
        %v1356 = vpack.c.bf16 %v1185, %v1182
        %v1357 = vpack.c.bf16 %v1193, %v1190
        %v1358 = vpack.c.bf16 %v1201, %v1198
        %v1359 = vpack.c.bf16 %v1209, %v1206
        %v1360 = vpack.c.bf16 %v1217, %v1214
        %v1361 = vpack.c.bf16 %v1225, %v1222
        %v1362 = vpack.c.bf16 %v1233, %v1230
        %v1363 = vpack.c.bf16 %v1241, %v1238
        %v1364 = vpack.c.bf16 %v1249, %v1246
        %v1365 = vpack.c.bf16 %v1257, %v1254
        %v1366 = vpack.c.bf16 %v1265, %v1262
        %v1367 = vpack.c.bf16 %v1273, %v1270
        %v1368 = vpack.c.bf16 %v1281, %v1278
        %v1369 = vpack.c.bf16 %v1289, %v1286
        %v1370 = vpack.c.bf16 %v1297, %v1294
        %v1371 = vpack.c.bf16 %v1305, %v1302
        %v1436 = vunpack.c.l.b16 %v1308
        %v1437 = vunpack.c.h.b16 %v1308
        %v1438 = vunpack.c.l.b16 %v1309
        %v1439 = vunpack.c.h.b16 %v1309
        %v1440 = vunpack.c.l.b16 %v1310
        %v1441 = vunpack.c.h.b16 %v1310
        %v1442 = vunpack.c.l.b16 %v1311
        %v1443 = vunpack.c.h.b16 %v1311
        %v1444 = vunpack.c.l.b16 %v1312
        %v1445 = vunpack.c.h.b16 %v1312
        %v1446 = vunpack.c.l.b16 %v1313
        %v1447 = vunpack.c.h.b16 %v1313
        %v1448 = vunpack.c.l.b16 %v1314
        %v1449 = vunpack.c.h.b16 %v1314
        %v1450 = vunpack.c.l.b16 %v1315
        %v1451 = vunpack.c.h.b16 %v1315
        %v1452 = vunpack.c.l.b16 %v1316
        %v1453 = vunpack.c.h.b16 %v1316
        %v1454 = vunpack.c.l.b16 %v1317
        %v1455 = vunpack.c.h.b16 %v1317
        %v1456 = vunpack.c.l.b16 %v1318
        %v1457 = vunpack.c.h.b16 %v1318
        %v1458 = vunpack.c.l.b16 %v1319
        %v1459 = vunpack.c.h.b16 %v1319
        %v1460 = vunpack.c.l.b16 %v1320
        %v1461 = vunpack.c.h.b16 %v1320
        %v1462 = vunpack.c.l.b16 %v1321
        %v1463 = vunpack.c.h.b16 %v1321
        %v1464 = vunpack.c.l.b16 %v1322
        %v1465 = vunpack.c.h.b16 %v1322
        %v1466 = vunpack.c.l.b16 %v1323
        %v1467 = vunpack.c.h.b16 %v1323
        %v1468 = vunpack.c.l.b16 %v1324
        %v1469 = vunpack.c.h.b16 %v1324
        %v1470 = vunpack.c.l.b16 %v1325
        %v1471 = vunpack.c.h.b16 %v1325
        %v1472 = vunpack.c.l.b16 %v1326
        %v1473 = vunpack.c.h.b16 %v1326
        %v1474 = vunpack.c.l.b16 %v1327
        %v1475 = vunpack.c.h.b16 %v1327
        %v1476 = vunpack.c.l.b16 %v1328
        %v1477 = vunpack.c.h.b16 %v1328
        %v1478 = vunpack.c.l.b16 %v1329
        %v1479 = vunpack.c.h.b16 %v1329
        %v1480 = vunpack.c.l.b16 %v1330
        %v1481 = vunpack.c.h.b16 %v1330
        %v1482 = vunpack.c.l.b16 %v1331
        %v1483 = vunpack.c.h.b16 %v1331
        %v1484 = vunpack.c.l.b16 %v1332
        %v1485 = vunpack.c.h.b16 %v1332
        %v1486 = vunpack.c.l.b16 %v1333
        %v1487 = vunpack.c.h.b16 %v1333
        %v1488 = vunpack.c.l.b16 %v1334
        %v1489 = vunpack.c.h.b16 %v1334
        %v1490 = vunpack.c.l.b16 %v1335
        %v1491 = vunpack.c.h.b16 %v1335
        %v1492 = vunpack.c.l.b16 %v1336
        %v1493 = vunpack.c.h.b16 %v1336
        %v1494 = vunpack.c.l.b16 %v1337
        %v1495 = vunpack.c.h.b16 %v1337
        %v1496 = vunpack.c.l.b16 %v1338
        %v1497 = vunpack.c.h.b16 %v1338
        %v1498 = vunpack.c.l.b16 %v1339
        %v1499 = vunpack.c.h.b16 %v1339
        %v1500 = vunpack.c.l.b16 %v1340
        %v1501 = vunpack.c.h.b16 %v1340
        %v1502 = vunpack.c.l.b16 %v1341
        %v1503 = vunpack.c.h.b16 %v1341
        %v1504 = vunpack.c.l.b16 %v1342
        %v1505 = vunpack.c.h.b16 %v1342
        %v1506 = vunpack.c.l.b16 %v1343
        %v1507 = vunpack.c.h.b16 %v1343
        %v1508 = vunpack.c.l.b16 %v1344
        %v1509 = vunpack.c.h.b16 %v1344
        %v1510 = vunpack.c.l.b16 %v1345
        %v1511 = vunpack.c.h.b16 %v1345
        %v1512 = vunpack.c.l.b16 %v1346
        %v1513 = vunpack.c.h.b16 %v1346
        %v1514 = vunpack.c.l.b16 %v1347
        %v1515 = vunpack.c.h.b16 %v1347
        %v1516 = vunpack.c.l.b16 %v1348
        %v1517 = vunpack.c.h.b16 %v1348
        %v1518 = vunpack.c.l.b16 %v1349
        %v1519 = vunpack.c.h.b16 %v1349
        %v1520 = vunpack.c.l.b16 %v1350
        %v1521 = vunpack.c.h.b16 %v1350
        %v1522 = vunpack.c.l.b16 %v1351
        %v1523 = vunpack.c.h.b16 %v1351
        %v1524 = vunpack.c.l.b16 %v1352
        %v1525 = vunpack.c.h.b16 %v1352
        %v1526 = vunpack.c.l.b16 %v1353
        %v1527 = vunpack.c.h.b16 %v1353
        %v1528 = vunpack.c.l.b16 %v1354
        %v1529 = vunpack.c.h.b16 %v1354
        %v1530 = vunpack.c.l.b16 %v1355
        %v1531 = vunpack.c.h.b16 %v1355
        %v1532 = vunpack.c.l.b16 %v1356
        %v1533 = vunpack.c.h.b16 %v1356
        %v1534 = vunpack.c.l.b16 %v1357
        %v1535 = vunpack.c.h.b16 %v1357
        %v1536 = vunpack.c.l.b16 %v1358
        %v1537 = vunpack.c.h.b16 %v1358
        %v1538 = vunpack.c.l.b16 %v1359
        %v1539 = vunpack.c.h.b16 %v1359
        %v1540 = vunpack.c.l.b16 %v1360
        %v1541 = vunpack.c.h.b16 %v1360
        %v1542 = vunpack.c.l.b16 %v1361
        %v1543 = vunpack.c.h.b16 %v1361
        %v1544 = vunpack.c.l.b16 %v1362
        %v1545 = vunpack.c.h.b16 %v1362
        %v1546 = vunpack.c.l.b16 %v1363
        %v1547 = vunpack.c.h.b16 %v1363
        %v1548 = vunpack.c.l.b16 %v1364
        %v1549 = vunpack.c.h.b16 %v1364
        %v1550 = vunpack.c.l.b16 %v1365
        %v1551 = vunpack.c.h.b16 %v1365
        %v1552 = vunpack.c.l.b16 %v1366
        %v1553 = vunpack.c.h.b16 %v1366
        %v1554 = vunpack.c.l.b16 %v1367
        %v1555 = vunpack.c.h.b16 %v1367
        %v1556 = vunpack.c.l.b16 %v1368
        %v1557 = vunpack.c.h.b16 %v1368
        %v1558 = vunpack.c.l.b16 %v1369
        %v1559 = vunpack.c.h.b16 %v1369
        %v1560 = vunpack.c.l.b16 %v1370
        %v1561 = vunpack.c.h.b16 %v1370
        %v1562 = vunpack.c.l.b16 %v1371
        %v1563 = vunpack.c.h.b16 %v1371
        %v1564 = vpack.c.b16 %v1436, %v1436
        %v1565 = vpack.c.b16 %v1437, %v1437
        %v1566 = vpack.c.b16 %v1438, %v1438
        %v1567 = vpack.c.b16 %v1439, %v1439
        %v1568 = vpack.c.b16 %v1440, %v1440
        %v1569 = vpack.c.b16 %v1441, %v1441
        %v1570 = vpack.c.b16 %v1442, %v1442
        %v1571 = vpack.c.b16 %v1443, %v1443
        %v1572 = vpack.c.b16 %v1444, %v1444
        %v1573 = vpack.c.b16 %v1445, %v1445
        %v1574 = vpack.c.b16 %v1446, %v1446
        %v1575 = vpack.c.b16 %v1447, %v1447
        %v1576 = vpack.c.b16 %v1448, %v1448
        %v1577 = vpack.c.b16 %v1449, %v1449
        %v1578 = vpack.c.b16 %v1450, %v1450
        %v1579 = vpack.c.b16 %v1451, %v1451
        %v1580 = vpack.c.b16 %v1452, %v1452
        %v1581 = vpack.c.b16 %v1453, %v1453
        %v1582 = vpack.c.b16 %v1454, %v1454
        %v1583 = vpack.c.b16 %v1455, %v1455
        %v1584 = vpack.c.b16 %v1456, %v1456
        %v1585 = vpack.c.b16 %v1457, %v1457
        %v1586 = vpack.c.b16 %v1458, %v1458
        %v1587 = vpack.c.b16 %v1459, %v1459
        %v1588 = vpack.c.b16 %v1460, %v1460
        %v1589 = vpack.c.b16 %v1461, %v1461
        %v1590 = vpack.c.b16 %v1462, %v1462
        %v1591 = vpack.c.b16 %v1463, %v1463
        %v1592 = vpack.c.b16 %v1464, %v1464
        %v1593 = vpack.c.b16 %v1465, %v1465
        %v1594 = vpack.c.b16 %v1466, %v1466
        %v1595 = vpack.c.b16 %v1467, %v1467
        %v1596 = vpack.c.b16 %v1468, %v1468
        %v1597 = vpack.c.b16 %v1469, %v1469
        %v1598 = vpack.c.b16 %v1470, %v1470
        %v1599 = vpack.c.b16 %v1471, %v1471
        %v1600 = vpack.c.b16 %v1472, %v1472
        %v1601 = vpack.c.b16 %v1473, %v1473
        %v1602 = vpack.c.b16 %v1474, %v1474
        %v1603 = vpack.c.b16 %v1475, %v1475
        %v1604 = vpack.c.b16 %v1476, %v1476
        %v1605 = vpack.c.b16 %v1477, %v1477
        %v1606 = vpack.c.b16 %v1478, %v1478
        %v1607 = vpack.c.b16 %v1479, %v1479
        %v1608 = vpack.c.b16 %v1480, %v1480
        %v1609 = vpack.c.b16 %v1481, %v1481
        %v1610 = vpack.c.b16 %v1482, %v1482
        %v1611 = vpack.c.b16 %v1483, %v1483
        %v1612 = vpack.c.b16 %v1484, %v1484
        %v1613 = vpack.c.b16 %v1485, %v1485
        %v1614 = vpack.c.b16 %v1486, %v1486
        %v1615 = vpack.c.b16 %v1487, %v1487
        %v1616 = vpack.c.b16 %v1488, %v1488
        %v1617 = vpack.c.b16 %v1489, %v1489
        %v1618 = vpack.c.b16 %v1490, %v1490
        %v1619 = vpack.c.b16 %v1491, %v1491
        %v1620 = vpack.c.b16 %v1492, %v1492
        %v1621 = vpack.c.b16 %v1493, %v1493
        %v1622 = vpack.c.b16 %v1494, %v1494
        %v1623 = vpack.c.b16 %v1495, %v1495
        %v1624 = vpack.c.b16 %v1496, %v1496
        %v1625 = vpack.c.b16 %v1497, %v1497
        %v1626 = vpack.c.b16 %v1498, %v1498
        %v1627 = vpack.c.b16 %v1499, %v1499
        %v1628 = vpack.c.b16 %v1500, %v1500
        %v1629 = vpack.c.b16 %v1501, %v1501
        %v1630 = vpack.c.b16 %v1502, %v1502
        %v1631 = vpack.c.b16 %v1503, %v1503
        %v1632 = vpack.c.b16 %v1504, %v1504
        %v1633 = vpack.c.b16 %v1505, %v1505
        %v1634 = vpack.c.b16 %v1506, %v1506
        %v1635 = vpack.c.b16 %v1507, %v1507
        %v1636 = vpack.c.b16 %v1508, %v1508
        %v1637 = vpack.c.b16 %v1509, %v1509
        %v1638 = vpack.c.b16 %v1510, %v1510
        %v1639 = vpack.c.b16 %v1511, %v1511
        %v1640 = vpack.c.b16 %v1512, %v1512
        %v1641 = vpack.c.b16 %v1513, %v1513
        %v1642 = vpack.c.b16 %v1514, %v1514
        %v1643 = vpack.c.b16 %v1515, %v1515
        %v1644 = vpack.c.b16 %v1516, %v1516
        %v1645 = vpack.c.b16 %v1517, %v1517
        %v1646 = vpack.c.b16 %v1518, %v1518
        %v1647 = vpack.c.b16 %v1519, %v1519
        %v1648 = vpack.c.b16 %v1520, %v1520
        %v1649 = vpack.c.b16 %v1521, %v1521
        %v1650 = vpack.c.b16 %v1522, %v1522
        %v1651 = vpack.c.b16 %v1523, %v1523
        %v1652 = vpack.c.b16 %v1524, %v1524
        %v1653 = vpack.c.b16 %v1525, %v1525
        %v1654 = vpack.c.b16 %v1526, %v1526
        %v1655 = vpack.c.b16 %v1527, %v1527
        %v1656 = vpack.c.b16 %v1528, %v1528
        %v1657 = vpack.c.b16 %v1529, %v1529
        %v1658 = vpack.c.b16 %v1530, %v1530
        %v1659 = vpack.c.b16 %v1531, %v1531
        %v1660 = vpack.c.b16 %v1532, %v1532
        %v1661 = vpack.c.b16 %v1533, %v1533
        %v1662 = vpack.c.b16 %v1534, %v1534
        %v1663 = vpack.c.b16 %v1535, %v1535
        %v1664 = vpack.c.b16 %v1536, %v1536
        %v1665 = vpack.c.b16 %v1537, %v1537
        %v1666 = vpack.c.b16 %v1538, %v1538
        %v1667 = vpack.c.b16 %v1539, %v1539
        %v1668 = vpack.c.b16 %v1540, %v1540
        %v1669 = vpack.c.b16 %v1541, %v1541
        %v1670 = vpack.c.b16 %v1542, %v1542
        %v1671 = vpack.c.b16 %v1543, %v1543
        %v1672 = vpack.c.b16 %v1544, %v1544
        %v1673 = vpack.c.b16 %v1545, %v1545
        %v1674 = vpack.c.b16 %v1546, %v1546
        %v1675 = vpack.c.b16 %v1547, %v1547
        %v1676 = vpack.c.b16 %v1548, %v1548
        %v1677 = vpack.c.b16 %v1549, %v1549
        %v1678 = vpack.c.b16 %v1550, %v1550
        %v1679 = vpack.c.b16 %v1551, %v1551
        %v1680 = vpack.c.b16 %v1552, %v1552
        %v1681 = vpack.c.b16 %v1553, %v1553
        %v1682 = vpack.c.b16 %v1554, %v1554
        %v1683 = vpack.c.b16 %v1555, %v1555
        %v1684 = vpack.c.b16 %v1556, %v1556
        %v1685 = vpack.c.b16 %v1557, %v1557
        %v1686 = vpack.c.b16 %v1558, %v1558
        %v1687 = vpack.c.b16 %v1559, %v1559
        %v1688 = vpack.c.b16 %v1560, %v1560
        %v1689 = vpack.c.b16 %v1561, %v1561
        %v1690 = vpack.c.b16 %v1562, %v1562
        %v1691 = vpack.c.b16 %v1563, %v1563
        %1820 = vst [vmem:[#allocation2] sm:$0xf] %v1564
        %1821 = vst [vmem:[#allocation2 + $0x4] sm:$0xf] %v1565
        %1822 = vst [vmem:[#allocation2 + $0x8] sm:$0xf] %v1566
        %1823 = vst [vmem:[#allocation2 + $0xc] sm:$0xf] %v1567
        %1824 = vst [vmem:[#allocation2 + $0x10] sm:$0xf] %v1568
        %1825 = vst [vmem:[#allocation2 + $0x14] sm:$0xf] %v1569
        %1826 = vst [vmem:[#allocation2 + $0x18] sm:$0xf] %v1570
        %1827 = vst [vmem:[#allocation2 + $0x1c] sm:$0xf] %v1571
        %1828 = vst [vmem:[#allocation2 + $0x20] sm:$0xf] %v1572
        %1829 = vst [vmem:[#allocation2 + $0x24] sm:$0xf] %v1573
        %1830 = vst [vmem:[#allocation2 + $0x28] sm:$0xf] %v1574
        %1831 = vst [vmem:[#allocation2 + $0x2c] sm:$0xf] %v1575
        %1832 = vst [vmem:[#allocation2 + $0x30] sm:$0xf] %v1576
        %1833 = vst [vmem:[#allocation2 + $0x34] sm:$0xf] %v1577
        %1834 = vst [vmem:[#allocation2 + $0x38] sm:$0xf] %v1578
        %1835 = vst [vmem:[#allocation2 + $0x3c] sm:$0xf] %v1579
        %1836 = vst [vmem:[#allocation2 + $0x40] sm:$0xf] %v1580
        %1837 = vst [vmem:[#allocation2 + $0x44] sm:$0xf] %v1581
        %1838 = vst [vmem:[#allocation2 + $0x48] sm:$0xf] %v1582
        %1839 = vst [vmem:[#allocation2 + $0x4c] sm:$0xf] %v1583
        %1840 = vst [vmem:[#allocation2 + $0x50] sm:$0xf] %v1584
        %1841 = vst [vmem:[#allocation2 + $0x54] sm:$0xf] %v1585
        %1842 = vst [vmem:[#allocation2 + $0x58] sm:$0xf] %v1586
        %1843 = vst [vmem:[#allocation2 + $0x5c] sm:$0xf] %v1587
        %1844 = vst [vmem:[#allocation2 + $0x60] sm:$0xf] %v1588
        %1845 = vst [vmem:[#allocation2 + $0x64] sm:$0xf] %v1589
        %1846 = vst [vmem:[#allocation2 + $0x68] sm:$0xf] %v1590
        %1847 = vst [vmem:[#allocation2 + $0x6c] sm:$0xf] %v1591
        %1848 = vst [vmem:[#allocation2 + $0x70] sm:$0xf] %v1592
        %1849 = vst [vmem:[#allocation2 + $0x74] sm:$0xf] %v1593
        %1850 = vst [vmem:[#allocation2 + $0x78] sm:$0xf] %v1594
        %1851 = vst [vmem:[#allocation2 + $0x7c] sm:$0xf] %v1595
        %1852 = vst [vmem:[#allocation2 + $0x80] sm:$0xf] %v1596
        %1853 = vst [vmem:[#allocation2 + $0x84] sm:$0xf] %v1597
        %1854 = vst [vmem:[#allocation2 + $0x88] sm:$0xf] %v1598
        %1855 = vst [vmem:[#allocation2 + $0x8c] sm:$0xf] %v1599
        %1856 = vst [vmem:[#allocation2 + $0x90] sm:$0xf] %v1600
        %1857 = vst [vmem:[#allocation2 + $0x94] sm:$0xf] %v1601
        %1858 = vst [vmem:[#allocation2 + $0x98] sm:$0xf] %v1602
        %1859 = vst [vmem:[#allocation2 + $0x9c] sm:$0xf] %v1603
        %1860 = vst [vmem:[#allocation2 + $0xa0] sm:$0xf] %v1604
        %1861 = vst [vmem:[#allocation2 + $0xa4] sm:$0xf] %v1605
        %1862 = vst [vmem:[#allocation2 + $0xa8] sm:$0xf] %v1606
        %1863 = vst [vmem:[#allocation2 + $0xac] sm:$0xf] %v1607
        %1864 = vst [vmem:[#allocation2 + $0xb0] sm:$0xf] %v1608
        %1865 = vst [vmem:[#allocation2 + $0xb4] sm:$0xf] %v1609
        %1866 = vst [vmem:[#allocation2 + $0xb8] sm:$0xf] %v1610
        %1867 = vst [vmem:[#allocation2 + $0xbc] sm:$0xf] %v1611
        %1868 = vst [vmem:[#allocation2 + $0xc0] sm:$0xf] %v1612
        %1869 = vst [vmem:[#allocation2 + $0xc4] sm:$0xf] %v1613
        %1870 = vst [vmem:[#allocation2 + $0xc8] sm:$0xf] %v1614
        %1871 = vst [vmem:[#allocation2 + $0xcc] sm:$0xf] %v1615
        %1872 = vst [vmem:[#allocation2 + $0xd0] sm:$0xf] %v1616
        %1873 = vst [vmem:[#allocation2 + $0xd4] sm:$0xf] %v1617
        %1874 = vst [vmem:[#allocation2 + $0xd8] sm:$0xf] %v1618
        %1875 = vst [vmem:[#allocation2 + $0xdc] sm:$0xf] %v1619
        %1876 = vst [vmem:[#allocation2 + $0xe0] sm:$0xf] %v1620
        %1877 = vst [vmem:[#allocation2 + $0xe4] sm:$0xf] %v1621
        %1878 = vst [vmem:[#allocation2 + $0xe8] sm:$0xf] %v1622
        %1879 = vst [vmem:[#allocation2 + $0xec] sm:$0xf] %v1623
        %1880 = vst [vmem:[#allocation2 + $0xf0] sm:$0xf] %v1624
        %1881 = vst [vmem:[#allocation2 + $0xf4] sm:$0xf] %v1625
        %1882 = vst [vmem:[#allocation2 + $0xf8] sm:$0xf] %v1626
        %1883 = vst [vmem:[#allocation2 + $0xfc] sm:$0xf] %v1627
        %1884 = vst [vmem:[#allocation2 + $0x100] sm:$0xf] %v1628
        %1885 = vst [vmem:[#allocation2 + $0x104] sm:$0xf] %v1629
        %1886 = vst [vmem:[#allocation2 + $0x108] sm:$0xf] %v1630
        %1887 = vst [vmem:[#allocation2 + $0x10c] sm:$0xf] %v1631
        %1888 = vst [vmem:[#allocation2 + $0x110] sm:$0xf] %v1632
        %1889 = vst [vmem:[#allocation2 + $0x114] sm:$0xf] %v1633
        %1890 = vst [vmem:[#allocation2 + $0x118] sm:$0xf] %v1634
        %1891 = vst [vmem:[#allocation2 + $0x11c] sm:$0xf] %v1635
        %1892 = vst [vmem:[#allocation2 + $0x120] sm:$0xf] %v1636
        %1893 = vst [vmem:[#allocation2 + $0x124] sm:$0xf] %v1637
        %1894 = vst [vmem:[#allocation2 + $0x128] sm:$0xf] %v1638
        %1895 = vst [vmem:[#allocation2 + $0x12c] sm:$0xf] %v1639
        %1896 = vst [vmem:[#allocation2 + $0x130] sm:$0xf] %v1640
        %1897 = vst [vmem:[#allocation2 + $0x134] sm:$0xf] %v1641
        %1898 = vst [vmem:[#allocation2 + $0x138] sm:$0xf] %v1642
        %1899 = vst [vmem:[#allocation2 + $0x13c] sm:$0xf] %v1643
        %1900 = vst [vmem:[#allocation2 + $0x140] sm:$0xf] %v1644
        %1901 = vst [vmem:[#allocation2 + $0x144] sm:$0xf] %v1645
        %1902 = vst [vmem:[#allocation2 + $0x148] sm:$0xf] %v1646
        %1903 = vst [vmem:[#allocation2 + $0x14c] sm:$0xf] %v1647
        %1904 = vst [vmem:[#allocation2 + $0x150] sm:$0xf] %v1648
        %1905 = vst [vmem:[#allocation2 + $0x154] sm:$0xf] %v1649
        %1906 = vst [vmem:[#allocation2 + $0x158] sm:$0xf] %v1650
        %1907 = vst [vmem:[#allocation2 + $0x15c] sm:$0xf] %v1651
        %1908 = vst [vmem:[#allocation2 + $0x160] sm:$0xf] %v1652
        %1909 = vst [vmem:[#allocation2 + $0x164] sm:$0xf] %v1653
        %1910 = vst [vmem:[#allocation2 + $0x168] sm:$0xf] %v1654
        %1911 = vst [vmem:[#allocation2 + $0x16c] sm:$0xf] %v1655
        %1912 = vst [vmem:[#allocation2 + $0x170] sm:$0xf] %v1656
        %1913 = vst [vmem:[#allocation2 + $0x174] sm:$0xf] %v1657
        %1914 = vst [vmem:[#allocation2 + $0x178] sm:$0xf] %v1658
        %1915 = vst [vmem:[#allocation2 + $0x17c] sm:$0xf] %v1659
        %1916 = vst [vmem:[#allocation2 + $0x180] sm:$0xf] %v1660
        %1917 = vst [vmem:[#allocation2 + $0x184] sm:$0xf] %v1661
        %1918 = vst [vmem:[#allocation2 + $0x188] sm:$0xf] %v1662
        %1919 = vst [vmem:[#allocation2 + $0x18c] sm:$0xf] %v1663
        %1920 = vst [vmem:[#allocation2 + $0x190] sm:$0xf] %v1664
        %1921 = vst [vmem:[#allocation2 + $0x194] sm:$0xf] %v1665
        %1922 = vst [vmem:[#allocation2 + $0x198] sm:$0xf] %v1666
        %1923 = vst [vmem:[#allocation2 + $0x19c] sm:$0xf] %v1667
        %1924 = vst [vmem:[#allocation2 + $0x1a0] sm:$0xf] %v1668
        %1925 = vst [vmem:[#allocation2 + $0x1a4] sm:$0xf] %v1669
        %1926 = vst [vmem:[#allocation2 + $0x1a8] sm:$0xf] %v1670
        %1927 = vst [vmem:[#allocation2 + $0x1ac] sm:$0xf] %v1671
        %1928 = vst [vmem:[#allocation2 + $0x1b0] sm:$0xf] %v1672
        %1929 = vst [vmem:[#allocation2 + $0x1b4] sm:$0xf] %v1673
        %1930 = vst [vmem:[#allocation2 + $0x1b8] sm:$0xf] %v1674
        %1931 = vst [vmem:[#allocation2 + $0x1bc] sm:$0xf] %v1675
        %1932 = vst [vmem:[#allocation2 + $0x1c0] sm:$0xf] %v1676
        %1933 = vst [vmem:[#allocation2 + $0x1c4] sm:$0xf] %v1677
        %1934 = vst [vmem:[#allocation2 + $0x1c8] sm:$0xf] %v1678
        %1935 = vst [vmem:[#allocation2 + $0x1cc] sm:$0xf] %v1679
        %1936 = vst [vmem:[#allocation2 + $0x1d0] sm:$0xf] %v1680
        %1937 = vst [vmem:[#allocation2 + $0x1d4] sm:$0xf] %v1681
        %1938 = vst [vmem:[#allocation2 + $0x1d8] sm:$0xf] %v1682
        %1939 = vst [vmem:[#allocation2 + $0x1dc] sm:$0xf] %v1683
        %1940 = vst [vmem:[#allocation2 + $0x1e0] sm:$0xf] %v1684
        %1941 = vst [vmem:[#allocation2 + $0x1e4] sm:$0xf] %v1685
        %1942 = vst [vmem:[#allocation2 + $0x1e8] sm:$0xf] %v1686
        %1943 = vst [vmem:[#allocation2 + $0x1ec] sm:$0xf] %v1687
        %1944 = vst [vmem:[#allocation2 + $0x1f0] sm:$0xf] %v1688
        %1945 = vst [vmem:[#allocation2 + $0x1f4] sm:$0xf] %v1689
        %1946 = vst [vmem:[#allocation2 + $0x1f8] sm:$0xf] %v1690
        %1947 = vst [vmem:[#allocation2 + $0x1fc] sm:$0xf] %v1691
        %v1948 = vld [vmem:[%s180] sm:$0xf]
        %v1949 = vld [vmem:[#allocation2] sm:$0xf]
        %v1950 = vld [vmem:[#allocation2 + $0x4] sm:$0xf]
        %v1951 = vld [vmem:[#allocation2 + $0x8] sm:$0xf]
        %v1952 = vld [vmem:[#allocation2 + $0xc] sm:$0xf]
        %v1953 = vld [vmem:[#allocation2 + $0x10] sm:$0xf]
        %v1954 = vld [vmem:[#allocation2 + $0x14] sm:$0xf]
        %v1955 = vld [vmem:[#allocation2 + $0x18] sm:$0xf]
        %v1956 = vld [vmem:[#allocation2 + $0x1c] sm:$0xf]
        %v1957 = vld [vmem:[#allocation2 + $0x20] sm:$0xf]
        %v1958 = vld [vmem:[#allocation2 + $0x24] sm:$0xf]
        %v1959 = vld [vmem:[#allocation2 + $0x28] sm:$0xf]
        %v1960 = vld [vmem:[#allocation2 + $0x2c] sm:$0xf]
        %v1961 = vld [vmem:[#allocation2 + $0x30] sm:$0xf]
        %v1962 = vld [vmem:[#allocation2 + $0x34] sm:$0xf]
        %v1963 = vld [vmem:[#allocation2 + $0x38] sm:$0xf]
        %v1964 = vld [vmem:[#allocation2 + $0x3c] sm:$0xf]
        %v1981 = vunpack.c.l.b16 %v1949
        %v1982 = vunpack.c.l.b16 %v1950
        %v1983 = vunpack.c.l.b16 %v1951
        %v1984 = vunpack.c.l.b16 %v1952
        %v1985 = vunpack.c.l.b16 %v1953
        %v1986 = vunpack.c.l.b16 %v1954
        %v1987 = vunpack.c.l.b16 %v1955
        %v1988 = vunpack.c.l.b16 %v1956
        %v1989 = vunpack.c.l.b16 %v1957
        %v1990 = vunpack.c.l.b16 %v1958
        %v1991 = vunpack.c.l.b16 %v1959
        %v1992 = vunpack.c.l.b16 %v1960
        %v1993 = vunpack.c.l.b16 %v1961
        %v1994 = vunpack.c.l.b16 %v1962
        %v1995 = vunpack.c.l.b16 %v1963
        %v1996 = vunpack.c.l.b16 %v1964
        %v1997 = vpack.c.b16 %v1982, %v1981
        %v1998 = vpack.c.b16 %v1984, %v1983
        %v1999 = vpack.c.b16 %v1986, %v1985
        %v2000 = vpack.c.b16 %v1988, %v1987
        %v2001 = vpack.c.b16 %v1990, %v1989
        %v2002 = vpack.c.b16 %v1992, %v1991
        %v2003 = vpack.c.b16 %v1994, %v1993
        %v2004 = vpack.c.b16 %v1996, %v1995
        %2013 = vmatprep.subr.bf16.mxu0 0
        %2014 = vmatpush1.bf16.msra.mxu0 %v2004
        %2015 = vmatprep.subr.bf16.mxu0 0
        %2016 = vmatpush1.bf16.msra.mxu0 %v2003
        %2017 = vmatprep.subr.bf16.mxu0 0
        %2018 = vmatpush1.bf16.msra.mxu0 %v2002
        %2019 = vmatprep.subr.bf16.mxu0 0
        %2020 = vmatpush1.bf16.msra.mxu0 %v2001
        %2021 = vmatprep.subr.bf16.mxu0 0
        %2022 = vmatpush1.bf16.msra.mxu0 %v2000
        %2023 = vmatprep.subr.bf16.mxu0 0
        %2024 = vmatpush1.bf16.msra.mxu0 %v1999
        %2025 = vmatprep.subr.bf16.mxu0 0
        %2026 = vmatpush1.bf16.msra.mxu0 %v1998
        %2027 = vmatprep.subr.bf16.mxu0 0
        %2028 = vmatpush1.bf16.msra.mxu0 %v1997
        %2029 = vmatprep.subr.bf16.mxu0 0
        %2030 = vmatpush2.bf16.msra.mxu0 0
        %2031 = vmatprep.subr.bf16.mxu0 0
        %2032 = vmatpush2.bf16.msra.mxu0 0
        %2033 = vmatprep.subr.bf16.mxu0 0
        %2034 = vmatpush2.bf16.msra.mxu0 0
        %2035 = vmatprep.subr.bf16.mxu0 0
        %2036 = vmatpush2.bf16.msra.mxu0 0
        %2037 = vmatprep.subr.bf16.mxu0 0
        %2038 = vmatpush2.bf16.msra.mxu0 0
        %2039 = vmatprep.subr.bf16.mxu0 0
        %2040 = vmatpush2.bf16.msra.mxu0 0
        %2041 = vmatprep.subr.bf16.mxu0 0
        %2042 = vmatpush2.bf16.msra.mxu0 0
        %2043 = vmatprep.subr.bf16.mxu0 0
        %2044 = vmatpush2.bf16.msra.mxu0 0
        %2045 = vmatprep.mubr.bf16.mxu0 0
        %2046 = vmatmul.mubr.bf16.gmra.mxu0 %v1948
        %v2047 = vpop.f32.mrf.mxu0
        %v2048 = vadd.f32 0.0, %v2047
        %v2049 = vpop.f32.mrf.mxu0
        %v2050 = vpop.f32.mrf.mxu0
        %v2051 = vpop.f32.mrf.mxu0
        %2052 = vdwg.mxu0
        %v2053 = vmax.f32 %v2048, 0.0
        %v2054 = vmin.f32 %v2053, 1.0
        %2055 = vst [vmem:[%s176] sm:$0xff] %v2054
        %s2056 = scalar_lea.vmem [#allocation2], 64
        %v2057 = vld [vmem:[%s2056] sm:$0xf]
        %v2058 = vld [vmem:[%s2056 + $0x4] sm:$0xf]
        %v2059 = vld [vmem:[%s2056 + $0x8] sm:$0xf]
        %v2060 = vld [vmem:[%s2056 + $0xc] sm:$0xf]
        %v2061 = vld [vmem:[%s2056 + $0x10] sm:$0xf]
        %v2062 = vld [vmem:[%s2056 + $0x14] sm:$0xf]
        %v2063 = vld [vmem:[%s2056 + $0x18] sm:$0xf]
        %v2064 = vld [vmem:[%s2056 + $0x1c] sm:$0xf]
        %v2065 = vld [vmem:[%s2056 + $0x20] sm:$0xf]
        %v2066 = vld [vmem:[%s2056 + $0x24] sm:$0xf]
        %v2067 = vld [vmem:[%s2056 + $0x28] sm:$0xf]
        %v2068 = vld [vmem:[%s2056 + $0x2c] sm:$0xf]
        %v2069 = vld [vmem:[%s2056 + $0x30] sm:$0xf]
        %v2070 = vld [vmem:[%s2056 + $0x34] sm:$0xf]
        %v2071 = vld [vmem:[%s2056 + $0x38] sm:$0xf]
        %v2072 = vld [vmem:[%s2056 + $0x3c] sm:$0xf]
        %v2089 = vunpack.c.l.b16 %v2057
        %v2090 = vunpack.c.l.b16 %v2058
        %v2091 = vunpack.c.l.b16 %v2059
        %v2092 = vunpack.c.l.b16 %v2060
        %v2093 = vunpack.c.l.b16 %v2061
        %v2094 = vunpack.c.l.b16 %v2062
        %v2095 = vunpack.c.l.b16 %v2063
        %v2096 = vunpack.c.l.b16 %v2064
        %v2097 = vunpack.c.l.b16 %v2065
        %v2098 = vunpack.c.l.b16 %v2066
        %v2099 = vunpack.c.l.b16 %v2067
        %v2100 = vunpack.c.l.b16 %v2068
        %v2101 = vunpack.c.l.b16 %v2069
        %v2102 = vunpack.c.l.b16 %v2070
        %v2103 = vunpack.c.l.b16 %v2071
        %v2104 = vunpack.c.l.b16 %v2072
        %v2105 = vpack.c.b16 %v2090, %v2089
        %v2106 = vpack.c.b16 %v2092, %v2091
        %v2107 = vpack.c.b16 %v2094, %v2093
        %v2108 = vpack.c.b16 %v2096, %v2095
        %v2109 = vpack.c.b16 %v2098, %v2097
        %v2110 = vpack.c.b16 %v2100, %v2099
        %v2111 = vpack.c.b16 %v2102, %v2101
        %v2112 = vpack.c.b16 %v2104, %v2103
        %2121 = vmatprep.subr.bf16.mxu0 0
        %2122 = vmatpush1.bf16.msra.mxu0 %v2112
        %2123 = vmatprep.subr.bf16.mxu0 0
        %2124 = vmatpush1.bf16.msra.mxu0 %v2111
        %2125 = vmatprep.subr.bf16.mxu0 0
        %2126 = vmatpush1.bf16.msra.mxu0 %v2110
        %2127 = vmatprep.subr.bf16.mxu0 0
        %2128 = vmatpush1.bf16.msra.mxu0 %v2109
        %2129 = vmatprep.subr.bf16.mxu0 0
        %2130 = vmatpush1.bf16.msra.mxu0 %v2108
        %2131 = vmatprep.subr.bf16.mxu0 0
        %2132 = vmatpush1.bf16.msra.mxu0 %v2107
        %2133 = vmatprep.subr.bf16.mxu0 0
        %2134 = vmatpush1.bf16.msra.mxu0 %v2106
        %2135 = vmatprep.subr.bf16.mxu0 0
        %2136 = vmatpush1.bf16.msra.mxu0 %v2105
        %2137 = vmatprep.subr.bf16.mxu0 0
        %2138 = vmatpush2.bf16.msra.mxu0 0
        %2139 = vmatprep.subr.bf16.mxu0 0
        %2140 = vmatpush2.bf16.msra.mxu0 0
        %2141 = vmatprep.subr.bf16.mxu0 0
        %2142 = vmatpush2.bf16.msra.mxu0 0
        %2143 = vmatprep.subr.bf16.mxu0 0
        %2144 = vmatpush2.bf16.msra.mxu0 0
        %2145 = vmatprep.subr.bf16.mxu0 0
        %2146 = vmatpush2.bf16.msra.mxu0 0
        %2147 = vmatprep.subr.bf16.mxu0 0
        %2148 = vmatpush2.bf16.msra.mxu0 0
        %2149 = vmatprep.subr.bf16.mxu0 0
        %2150 = vmatpush2.bf16.msra.mxu0 0
        %2151 = vmatprep.subr.bf16.mxu0 0
        %2152 = vmatpush2.bf16.msra.mxu0 0
        %2153 = vmatprep.mubr.bf16.mxu0 0
        %2154 = vmatmul.mubr.bf16.gmra.mxu0 %v1948
        %v2155 = vpop.f32.mrf.mxu0
        %v2156 = vadd.f32 0.0, %v2155
        %v2157 = vpop.f32.mrf.mxu0
        %v2158 = vpop.f32.mrf.mxu0
        %v2159 = vpop.f32.mrf.mxu0
        %2160 = vdwg.mxu0
        %v2161 = vmax.f32 %v2156, 0.0
        %v2162 = vmin.f32 %v2161, 1.0
        %s2163 = scalar_lea.vmem %s176, 8 [#allocation3]
        %2164 = vst [vmem:[%s2163] sm:$0xff] %v2162
        %s2165 = scalar_lea.vmem [#allocation2], 128
        %v2166 = vld [vmem:[%s2165] sm:$0xf]
        %v2167 = vld [vmem:[%s2165 + $0x4] sm:$0xf]
        %v2168 = vld [vmem:[%s2165 + $0x8] sm:$0xf]
        %v2169 = vld [vmem:[%s2165 + $0xc] sm:$0xf]
        %v2170 = vld [vmem:[%s2165 + $0x10] sm:$0xf]
        %v2171 = vld [vmem:[%s2165 + $0x14] sm:$0xf]
        %v2172 = vld [vmem:[%s2165 + $0x18] sm:$0xf]
        %v2173 = vld [vmem:[%s2165 + $0x1c] sm:$0xf]
        %v2174 = vld [vmem:[%s2165 + $0x20] sm:$0xf]
        %v2175 = vld [vmem:[%s2165 + $0x24] sm:$0xf]
        %v2176 = vld [vmem:[%s2165 + $0x28] sm:$0xf]
        %v2177 = vld [vmem:[%s2165 + $0x2c] sm:$0xf]
        %v2178 = vld [vmem:[%s2165 + $0x30] sm:$0xf]
        %v2179 = vld [vmem:[%s2165 + $0x34] sm:$0xf]
        %v2180 = vld [vmem:[%s2165 + $0x38] sm:$0xf]
        %v2181 = vld [vmem:[%s2165 + $0x3c] sm:$0xf]
        %v2198 = vunpack.c.l.b16 %v2166
        %v2199 = vunpack.c.l.b16 %v2167
        %v2200 = vunpack.c.l.b16 %v2168
        %v2201 = vunpack.c.l.b16 %v2169
        %v2202 = vunpack.c.l.b16 %v2170
        %v2203 = vunpack.c.l.b16 %v2171
        %v2204 = vunpack.c.l.b16 %v2172
        %v2205 = vunpack.c.l.b16 %v2173
        %v2206 = vunpack.c.l.b16 %v2174
        %v2207 = vunpack.c.l.b16 %v2175
        %v2208 = vunpack.c.l.b16 %v2176
        %v2209 = vunpack.c.l.b16 %v2177
        %v2210 = vunpack.c.l.b16 %v2178
        %v2211 = vunpack.c.l.b16 %v2179
        %v2212 = vunpack.c.l.b16 %v2180
        %v2213 = vunpack.c.l.b16 %v2181
        %v2214 = vpack.c.b16 %v2199, %v2198
        %v2215 = vpack.c.b16 %v2201, %v2200
        %v2216 = vpack.c.b16 %v2203, %v2202
        %v2217 = vpack.c.b16 %v2205, %v2204
        %v2218 = vpack.c.b16 %v2207, %v2206
        %v2219 = vpack.c.b16 %v2209, %v2208
        %v2220 = vpack.c.b16 %v2211, %v2210
        %v2221 = vpack.c.b16 %v2213, %v2212
        %2230 = vmatprep.subr.bf16.mxu0 0
        %2231 = vmatpush1.bf16.msra.mxu0 %v2221
        %2232 = vmatprep.subr.bf16.mxu0 0
        %2233 = vmatpush1.bf16.msra.mxu0 %v2220
        %2234 = vmatprep.subr.bf16.mxu0 0
        %2235 = vmatpush1.bf16.msra.mxu0 %v2219
        %2236 = vmatprep.subr.bf16.mxu0 0
        %2237 = vmatpush1.bf16.msra.mxu0 %v2218
        %2238 = vmatprep.subr.bf16.mxu0 0
        %2239 = vmatpush1.bf16.msra.mxu0 %v2217
        %2240 = vmatprep.subr.bf16.mxu0 0
        %2241 = vmatpush1.bf16.msra.mxu0 %v2216
        %2242 = vmatprep.subr.bf16.mxu0 0
        %2243 = vmatpush1.bf16.msra.mxu0 %v2215
        %2244 = vmatprep.subr.bf16.mxu0 0
        %2245 = vmatpush1.bf16.msra.mxu0 %v2214
        %2246 = vmatprep.subr.bf16.mxu0 0
        %2247 = vmatpush2.bf16.msra.mxu0 0
        %2248 = vmatprep.subr.bf16.mxu0 0
        %2249 = vmatpush2.bf16.msra.mxu0 0
        %2250 = vmatprep.subr.bf16.mxu0 0
        %2251 = vmatpush2.bf16.msra.mxu0 0
        %2252 = vmatprep.subr.bf16.mxu0 0
        %2253 = vmatpush2.bf16.msra.mxu0 0
        %2254 = vmatprep.subr.bf16.mxu0 0
        %2255 = vmatpush2.bf16.msra.mxu0 0
        %2256 = vmatprep.subr.bf16.mxu0 0
        %2257 = vmatpush2.bf16.msra.mxu0 0
        %2258 = vmatprep.subr.bf16.mxu0 0
        %2259 = vmatpush2.bf16.msra.mxu0 0
        %2260 = vmatprep.subr.bf16.mxu0 0
        %2261 = vmatpush2.bf16.msra.mxu0 0
        %2262 = vmatprep.mubr.bf16.mxu0 0
        %2263 = vmatmul.mubr.bf16.gmra.mxu0 %v1948
        %v2264 = vpop.f32.mrf.mxu0
        %v2265 = vadd.f32 0.0, %v2264
        %v2266 = vpop.f32.mrf.mxu0
        %v2267 = vpop.f32.mrf.mxu0
        %v2268 = vpop.f32.mrf.mxu0
        %2269 = vdwg.mxu0
        %v2270 = vmax.f32 %v2265, 0.0
        %v2271 = vmin.f32 %v2270, 1.0
        %s2272 = scalar_lea.vmem %s176, 16 [#allocation3]
        %2273 = vst [vmem:[%s2272] sm:$0xff] %v2271
        %s2274 = scalar_lea.vmem [#allocation2], 192
        %v2275 = vld [vmem:[%s2274] sm:$0xf]
        %v2276 = vld [vmem:[%s2274 + $0x4] sm:$0xf]
        %v2277 = vld [vmem:[%s2274 + $0x8] sm:$0xf]
        %v2278 = vld [vmem:[%s2274 + $0xc] sm:$0xf]
        %v2279 = vld [vmem:[%s2274 + $0x10] sm:$0xf]
        %v2280 = vld [vmem:[%s2274 + $0x14] sm:$0xf]
        %v2281 = vld [vmem:[%s2274 + $0x18] sm:$0xf]
        %v2282 = vld [vmem:[%s2274 + $0x1c] sm:$0xf]
        %v2283 = vld [vmem:[%s2274 + $0x20] sm:$0xf]
        %v2284 = vld [vmem:[%s2274 + $0x24] sm:$0xf]
        %v2285 = vld [vmem:[%s2274 + $0x28] sm:$0xf]
        %v2286 = vld [vmem:[%s2274 + $0x2c] sm:$0xf]
        %v2287 = vld [vmem:[%s2274 + $0x30] sm:$0xf]
        %v2288 = vld [vmem:[%s2274 + $0x34] sm:$0xf]
        %v2289 = vld [vmem:[%s2274 + $0x38] sm:$0xf]
        %v2290 = vld [vmem:[%s2274 + $0x3c] sm:$0xf]
        %v2307 = vunpack.c.l.b16 %v2275
        %v2308 = vunpack.c.l.b16 %v2276
        %v2309 = vunpack.c.l.b16 %v2277
        %v2310 = vunpack.c.l.b16 %v2278
        %v2311 = vunpack.c.l.b16 %v2279
        %v2312 = vunpack.c.l.b16 %v2280
        %v2313 = vunpack.c.l.b16 %v2281
        %v2314 = vunpack.c.l.b16 %v2282
        %v2315 = vunpack.c.l.b16 %v2283
        %v2316 = vunpack.c.l.b16 %v2284
        %v2317 = vunpack.c.l.b16 %v2285
        %v2318 = vunpack.c.l.b16 %v2286
        %v2319 = vunpack.c.l.b16 %v2287
        %v2320 = vunpack.c.l.b16 %v2288
        %v2321 = vunpack.c.l.b16 %v2289
        %v2322 = vunpack.c.l.b16 %v2290
        %v2323 = vpack.c.b16 %v2308, %v2307
        %v2324 = vpack.c.b16 %v2310, %v2309
        %v2325 = vpack.c.b16 %v2312, %v2311
        %v2326 = vpack.c.b16 %v2314, %v2313
        %v2327 = vpack.c.b16 %v2316, %v2315
        %v2328 = vpack.c.b16 %v2318, %v2317
        %v2329 = vpack.c.b16 %v2320, %v2319
        %v2330 = vpack.c.b16 %v2322, %v2321
        %2339 = vmatprep.subr.bf16.mxu0 0
        %2340 = vmatpush1.bf16.msra.mxu0 %v2330
        %2341 = vmatprep.subr.bf16.mxu0 0
        %2342 = vmatpush1.bf16.msra.mxu0 %v2329
        %2343 = vmatprep.subr.bf16.mxu0 0
        %2344 = vmatpush1.bf16.msra.mxu0 %v2328
        %2345 = vmatprep.subr.bf16.mxu0 0
        %2346 = vmatpush1.bf16.msra.mxu0 %v2327
        %2347 = vmatprep.subr.bf16.mxu0 0
        %2348 = vmatpush1.bf16.msra.mxu0 %v2326
        %2349 = vmatprep.subr.bf16.mxu0 0
        %2350 = vmatpush1.bf16.msra.mxu0 %v2325
        %2351 = vmatprep.subr.bf16.mxu0 0
        %2352 = vmatpush1.bf16.msra.mxu0 %v2324
        %2353 = vmatprep.subr.bf16.mxu0 0
        %2354 = vmatpush1.bf16.msra.mxu0 %v2323
        %2355 = vmatprep.subr.bf16.mxu0 0
        %2356 = vmatpush2.bf16.msra.mxu0 0
        %2357 = vmatprep.subr.bf16.mxu0 0
        %2358 = vmatpush2.bf16.msra.mxu0 0
        %2359 = vmatprep.subr.bf16.mxu0 0
        %2360 = vmatpush2.bf16.msra.mxu0 0
        %2361 = vmatprep.subr.bf16.mxu0 0
        %2362 = vmatpush2.bf16.msra.mxu0 0
        %2363 = vmatprep.subr.bf16.mxu0 0
        %2364 = vmatpush2.bf16.msra.mxu0 0
        %2365 = vmatprep.subr.bf16.mxu0 0
        %2366 = vmatpush2.bf16.msra.mxu0 0
        %2367 = vmatprep.subr.bf16.mxu0 0
        %2368 = vmatpush2.bf16.msra.mxu0 0
        %2369 = vmatprep.subr.bf16.mxu0 0
        %2370 = vmatpush2.bf16.msra.mxu0 0
        %2371 = vmatprep.mubr.bf16.mxu0 0
        %2372 = vmatmul.mubr.bf16.gmra.mxu0 %v1948
        %v2373 = vpop.f32.mrf.mxu0
        %v2374 = vadd.f32 0.0, %v2373
        %v2375 = vpop.f32.mrf.mxu0
        %v2376 = vpop.f32.mrf.mxu0
        %v2377 = vpop.f32.mrf.mxu0
        %2378 = vdwg.mxu0
        %v2379 = vmax.f32 %v2374, 0.0
        %v2380 = vmin.f32 %v2379, 1.0
        %s2381 = scalar_lea.vmem %s176, 24 [#allocation3]
        %2382 = vst [vmem:[%s2381] sm:$0xff] %v2380
        %s2383 = scalar_lea.vmem [#allocation2], 256
        %v2384 = vld [vmem:[%s2383] sm:$0xf]
        %v2385 = vld [vmem:[%s2383 + $0x4] sm:$0xf]
        %v2386 = vld [vmem:[%s2383 + $0x8] sm:$0xf]
        %v2387 = vld [vmem:[%s2383 + $0xc] sm:$0xf]
        %v2388 = vld [vmem:[%s2383 + $0x10] sm:$0xf]
        %v2389 = vld [vmem:[%s2383 + $0x14] sm:$0xf]
        %v2390 = vld [vmem:[%s2383 + $0x18] sm:$0xf]
        %v2391 = vld [vmem:[%s2383 + $0x1c] sm:$0xf]
        %v2392 = vld [vmem:[%s2383 + $0x20] sm:$0xf]
        %v2393 = vld [vmem:[%s2383 + $0x24] sm:$0xf]
        %v2394 = vld [vmem:[%s2383 + $0x28] sm:$0xf]
        %v2395 = vld [vmem:[%s2383 + $0x2c] sm:$0xf]
        %v2396 = vld [vmem:[%s2383 + $0x30] sm:$0xf]
        %v2397 = vld [vmem:[%s2383 + $0x34] sm:$0xf]
        %v2398 = vld [vmem:[%s2383 + $0x38] sm:$0xf]
        %v2399 = vld [vmem:[%s2383 + $0x3c] sm:$0xf]
        %v2416 = vunpack.c.l.b16 %v2384
        %v2417 = vunpack.c.l.b16 %v2385
        %v2418 = vunpack.c.l.b16 %v2386
        %v2419 = vunpack.c.l.b16 %v2387
        %v2420 = vunpack.c.l.b16 %v2388
        %v2421 = vunpack.c.l.b16 %v2389
        %v2422 = vunpack.c.l.b16 %v2390
        %v2423 = vunpack.c.l.b16 %v2391
        %v2424 = vunpack.c.l.b16 %v2392
        %v2425 = vunpack.c.l.b16 %v2393
        %v2426 = vunpack.c.l.b16 %v2394
        %v2427 = vunpack.c.l.b16 %v2395
        %v2428 = vunpack.c.l.b16 %v2396
        %v2429 = vunpack.c.l.b16 %v2397
        %v2430 = vunpack.c.l.b16 %v2398
        %v2431 = vunpack.c.l.b16 %v2399
        %v2432 = vpack.c.b16 %v2417, %v2416
        %v2433 = vpack.c.b16 %v2419, %v2418
        %v2434 = vpack.c.b16 %v2421, %v2420
        %v2435 = vpack.c.b16 %v2423, %v2422
        %v2436 = vpack.c.b16 %v2425, %v2424
        %v2437 = vpack.c.b16 %v2427, %v2426
        %v2438 = vpack.c.b16 %v2429, %v2428
        %v2439 = vpack.c.b16 %v2431, %v2430
        %2448 = vmatprep.subr.bf16.mxu0 0
        %2449 = vmatpush1.bf16.msra.mxu0 %v2439
        %2450 = vmatprep.subr.bf16.mxu0 0
        %2451 = vmatpush1.bf16.msra.mxu0 %v2438
        %2452 = vmatprep.subr.bf16.mxu0 0
        %2453 = vmatpush1.bf16.msra.mxu0 %v2437
        %2454 = vmatprep.subr.bf16.mxu0 0
        %2455 = vmatpush1.bf16.msra.mxu0 %v2436
        %2456 = vmatprep.subr.bf16.mxu0 0
        %2457 = vmatpush1.bf16.msra.mxu0 %v2435
        %2458 = vmatprep.subr.bf16.mxu0 0
        %2459 = vmatpush1.bf16.msra.mxu0 %v2434
        %2460 = vmatprep.subr.bf16.mxu0 0
        %2461 = vmatpush1.bf16.msra.mxu0 %v2433
        %2462 = vmatprep.subr.bf16.mxu0 0
        %2463 = vmatpush1.bf16.msra.mxu0 %v2432
        %2464 = vmatprep.subr.bf16.mxu0 0
        %2465 = vmatpush2.bf16.msra.mxu0 0
        %2466 = vmatprep.subr.bf16.mxu0 0
        %2467 = vmatpush2.bf16.msra.mxu0 0
        %2468 = vmatprep.subr.bf16.mxu0 0
        %2469 = vmatpush2.bf16.msra.mxu0 0
        %2470 = vmatprep.subr.bf16.mxu0 0
        %2471 = vmatpush2.bf16.msra.mxu0 0
        %2472 = vmatprep.subr.bf16.mxu0 0
        %2473 = vmatpush2.bf16.msra.mxu0 0
        %2474 = vmatprep.subr.bf16.mxu0 0
        %2475 = vmatpush2.bf16.msra.mxu0 0
        %2476 = vmatprep.subr.bf16.mxu0 0
        %2477 = vmatpush2.bf16.msra.mxu0 0
        %2478 = vmatprep.subr.bf16.mxu0 0
        %2479 = vmatpush2.bf16.msra.mxu0 0
        %2480 = vmatprep.mubr.bf16.mxu0 0
        %2481 = vmatmul.mubr.bf16.gmra.mxu0 %v1948
        %v2482 = vpop.f32.mrf.mxu0
        %v2483 = vadd.f32 0.0, %v2482
        %v2484 = vpop.f32.mrf.mxu0
        %v2485 = vpop.f32.mrf.mxu0
        %v2486 = vpop.f32.mrf.mxu0
        %2487 = vdwg.mxu0
        %v2488 = vmax.f32 %v2483, 0.0
        %v2489 = vmin.f32 %v2488, 1.0
        %s2490 = scalar_lea.vmem %s176, 32 [#allocation3]
        %2491 = vst [vmem:[%s2490] sm:$0xff] %v2489
        %s2492 = scalar_lea.vmem [#allocation2], 320
        %v2493 = vld [vmem:[%s2492] sm:$0xf]
        %v2494 = vld [vmem:[%s2492 + $0x4] sm:$0xf]
        %v2495 = vld [vmem:[%s2492 + $0x8] sm:$0xf]
        %v2496 = vld [vmem:[%s2492 + $0xc] sm:$0xf]
        %v2497 = vld [vmem:[%s2492 + $0x10] sm:$0xf]
        %v2498 = vld [vmem:[%s2492 + $0x14] sm:$0xf]
        %v2499 = vld [vmem:[%s2492 + $0x18] sm:$0xf]
        %v2500 = vld [vmem:[%s2492 + $0x1c] sm:$0xf]
        %v2501 = vld [vmem:[%s2492 + $0x20] sm:$0xf]
        %v2502 = vld [vmem:[%s2492 + $0x24] sm:$0xf]
        %v2503 = vld [vmem:[%s2492 + $0x28] sm:$0xf]
        %v2504 = vld [vmem:[%s2492 + $0x2c] sm:$0xf]
        %v2505 = vld [vmem:[%s2492 + $0x30] sm:$0xf]
        %v2506 = vld [vmem:[%s2492 + $0x34] sm:$0xf]
        %v2507 = vld [vmem:[%s2492 + $0x38] sm:$0xf]
        %v2508 = vld [vmem:[%s2492 + $0x3c] sm:$0xf]
        %v2525 = vunpack.c.l.b16 %v2493
        %v2526 = vunpack.c.l.b16 %v2494
        %v2527 = vunpack.c.l.b16 %v2495
        %v2528 = vunpack.c.l.b16 %v2496
        %v2529 = vunpack.c.l.b16 %v2497
        %v2530 = vunpack.c.l.b16 %v2498
        %v2531 = vunpack.c.l.b16 %v2499
        %v2532 = vunpack.c.l.b16 %v2500
        %v2533 = vunpack.c.l.b16 %v2501
        %v2534 = vunpack.c.l.b16 %v2502
        %v2535 = vunpack.c.l.b16 %v2503
        %v2536 = vunpack.c.l.b16 %v2504
        %v2537 = vunpack.c.l.b16 %v2505
        %v2538 = vunpack.c.l.b16 %v2506
        %v2539 = vunpack.c.l.b16 %v2507
        %v2540 = vunpack.c.l.b16 %v2508
        %v2541 = vpack.c.b16 %v2526, %v2525
        %v2542 = vpack.c.b16 %v2528, %v2527
        %v2543 = vpack.c.b16 %v2530, %v2529
        %v2544 = vpack.c.b16 %v2532, %v2531
        %v2545 = vpack.c.b16 %v2534, %v2533
        %v2546 = vpack.c.b16 %v2536, %v2535
        %v2547 = vpack.c.b16 %v2538, %v2537
        %v2548 = vpack.c.b16 %v2540, %v2539
        %2557 = vmatprep.subr.bf16.mxu0 0
        %2558 = vmatpush1.bf16.msra.mxu0 %v2548
        %2559 = vmatprep.subr.bf16.mxu0 0
        %2560 = vmatpush1.bf16.msra.mxu0 %v2547
        %2561 = vmatprep.subr.bf16.mxu0 0
        %2562 = vmatpush1.bf16.msra.mxu0 %v2546
        %2563 = vmatprep.subr.bf16.mxu0 0
        %2564 = vmatpush1.bf16.msra.mxu0 %v2545
        %2565 = vmatprep.subr.bf16.mxu0 0
        %2566 = vmatpush1.bf16.msra.mxu0 %v2544
        %2567 = vmatprep.subr.bf16.mxu0 0
        %2568 = vmatpush1.bf16.msra.mxu0 %v2543
        %2569 = vmatprep.subr.bf16.mxu0 0
        %2570 = vmatpush1.bf16.msra.mxu0 %v2542
        %2571 = vmatprep.subr.bf16.mxu0 0
        %2572 = vmatpush1.bf16.msra.mxu0 %v2541
        %2573 = vmatprep.subr.bf16.mxu0 0
        %2574 = vmatpush2.bf16.msra.mxu0 0
        %2575 = vmatprep.subr.bf16.mxu0 0
        %2576 = vmatpush2.bf16.msra.mxu0 0
        %2577 = vmatprep.subr.bf16.mxu0 0
        %2578 = vmatpush2.bf16.msra.mxu0 0
        %2579 = vmatprep.subr.bf16.mxu0 0
        %2580 = vmatpush2.bf16.msra.mxu0 0
        %2581 = vmatprep.subr.bf16.mxu0 0
        %2582 = vmatpush2.bf16.msra.mxu0 0
        %2583 = vmatprep.subr.bf16.mxu0 0
        %2584 = vmatpush2.bf16.msra.mxu0 0
        %2585 = vmatprep.subr.bf16.mxu0 0
        %2586 = vmatpush2.bf16.msra.mxu0 0
        %2587 = vmatprep.subr.bf16.mxu0 0
        %2588 = vmatpush2.bf16.msra.mxu0 0
        %2589 = vmatprep.mubr.bf16.mxu0 0
        %2590 = vmatmul.mubr.bf16.gmra.mxu0 %v1948
        %v2591 = vpop.f32.mrf.mxu0
        %v2592 = vadd.f32 0.0, %v2591
        %v2593 = vpop.f32.mrf.mxu0
        %v2594 = vpop.f32.mrf.mxu0
        %v2595 = vpop.f32.mrf.mxu0
        %2596 = vdwg.mxu0
        %v2597 = vmax.f32 %v2592, 0.0
        %v2598 = vmin.f32 %v2597, 1.0
        %s2599 = scalar_lea.vmem %s176, 40 [#allocation3]
        %2600 = vst [vmem:[%s2599] sm:$0xff] %v2598
        %s2601 = scalar_lea.vmem [#allocation2], 384
        %v2602 = vld [vmem:[%s2601] sm:$0xf]
        %v2603 = vld [vmem:[%s2601 + $0x4] sm:$0xf]
        %v2604 = vld [vmem:[%s2601 + $0x8] sm:$0xf]
        %v2605 = vld [vmem:[%s2601 + $0xc] sm:$0xf]
        %v2606 = vld [vmem:[%s2601 + $0x10] sm:$0xf]
        %v2607 = vld [vmem:[%s2601 + $0x14] sm:$0xf]
        %v2608 = vld [vmem:[%s2601 + $0x18] sm:$0xf]
        %v2609 = vld [vmem:[%s2601 + $0x1c] sm:$0xf]
        %v2610 = vld [vmem:[%s2601 + $0x20] sm:$0xf]
        %v2611 = vld [vmem:[%s2601 + $0x24] sm:$0xf]
        %v2612 = vld [vmem:[%s2601 + $0x28] sm:$0xf]
        %v2613 = vld [vmem:[%s2601 + $0x2c] sm:$0xf]
        %v2614 = vld [vmem:[%s2601 + $0x30] sm:$0xf]
        %v2615 = vld [vmem:[%s2601 + $0x34] sm:$0xf]
        %v2616 = vld [vmem:[%s2601 + $0x38] sm:$0xf]
        %v2617 = vld [vmem:[%s2601 + $0x3c] sm:$0xf]
        %v2634 = vunpack.c.l.b16 %v2602
        %v2635 = vunpack.c.l.b16 %v2603
        %v2636 = vunpack.c.l.b16 %v2604
        %v2637 = vunpack.c.l.b16 %v2605
        %v2638 = vunpack.c.l.b16 %v2606
        %v2639 = vunpack.c.l.b16 %v2607
        %v2640 = vunpack.c.l.b16 %v2608
        %v2641 = vunpack.c.l.b16 %v2609
        %v2642 = vunpack.c.l.b16 %v2610
        %v2643 = vunpack.c.l.b16 %v2611
        %v2644 = vunpack.c.l.b16 %v2612
        %v2645 = vunpack.c.l.b16 %v2613
        %v2646 = vunpack.c.l.b16 %v2614
        %v2647 = vunpack.c.l.b16 %v2615
        %v2648 = vunpack.c.l.b16 %v2616
        %v2649 = vunpack.c.l.b16 %v2617
        %v2650 = vpack.c.b16 %v2635, %v2634
        %v2651 = vpack.c.b16 %v2637, %v2636
        %v2652 = vpack.c.b16 %v2639, %v2638
        %v2653 = vpack.c.b16 %v2641, %v2640
        %v2654 = vpack.c.b16 %v2643, %v2642
        %v2655 = vpack.c.b16 %v2645, %v2644
        %v2656 = vpack.c.b16 %v2647, %v2646
        %v2657 = vpack.c.b16 %v2649, %v2648
        %2666 = vmatprep.subr.bf16.mxu0 0
        %2667 = vmatpush1.bf16.msra.mxu0 %v2657
        %2668 = vmatprep.subr.bf16.mxu0 0
        %2669 = vmatpush1.bf16.msra.mxu0 %v2656
        %2670 = vmatprep.subr.bf16.mxu0 0
        %2671 = vmatpush1.bf16.msra.mxu0 %v2655
        %2672 = vmatprep.subr.bf16.mxu0 0
        %2673 = vmatpush1.bf16.msra.mxu0 %v2654
        %2674 = vmatprep.subr.bf16.mxu0 0
        %2675 = vmatpush1.bf16.msra.mxu0 %v2653
        %2676 = vmatprep.subr.bf16.mxu0 0
        %2677 = vmatpush1.bf16.msra.mxu0 %v2652
        %2678 = vmatprep.subr.bf16.mxu0 0
        %2679 = vmatpush1.bf16.msra.mxu0 %v2651
        %2680 = vmatprep.subr.bf16.mxu0 0
        %2681 = vmatpush1.bf16.msra.mxu0 %v2650
        %2682 = vmatprep.subr.bf16.mxu0 0
        %2683 = vmatpush2.bf16.msra.mxu0 0
        %2684 = vmatprep.subr.bf16.mxu0 0
        %2685 = vmatpush2.bf16.msra.mxu0 0
        %2686 = vmatprep.subr.bf16.mxu0 0
        %2687 = vmatpush2.bf16.msra.mxu0 0
        %2688 = vmatprep.subr.bf16.mxu0 0
        %2689 = vmatpush2.bf16.msra.mxu0 0
        %2690 = vmatprep.subr.bf16.mxu0 0
        %2691 = vmatpush2.bf16.msra.mxu0 0
        %2692 = vmatprep.subr.bf16.mxu0 0
        %2693 = vmatpush2.bf16.msra.mxu0 0
        %2694 = vmatprep.subr.bf16.mxu0 0
        %2695 = vmatpush2.bf16.msra.mxu0 0
        %2696 = vmatprep.subr.bf16.mxu0 0
        %2697 = vmatpush2.bf16.msra.mxu0 0
        %2698 = vmatprep.mubr.bf16.mxu0 0
        %2699 = vmatmul.mubr.bf16.gmra.mxu0 %v1948
        %v2700 = vpop.f32.mrf.mxu0
        %v2701 = vadd.f32 0.0, %v2700
        %v2702 = vpop.f32.mrf.mxu0
        %v2703 = vpop.f32.mrf.mxu0
        %v2704 = vpop.f32.mrf.mxu0
        %2705 = vdwg.mxu0
        %v2706 = vmax.f32 %v2701, 0.0
        %v2707 = vmin.f32 %v2706, 1.0
        %s2708 = scalar_lea.vmem %s176, 48 [#allocation3]
        %2709 = vst [vmem:[%s2708] sm:$0xff] %v2707
        %s2710 = scalar_lea.vmem [#allocation2], 448
        %v2711 = vld [vmem:[%s2710] sm:$0xf]
        %v2712 = vld [vmem:[%s2710 + $0x4] sm:$0xf]
        %v2713 = vld [vmem:[%s2710 + $0x8] sm:$0xf]
        %v2714 = vld [vmem:[%s2710 + $0xc] sm:$0xf]
        %v2715 = vld [vmem:[%s2710 + $0x10] sm:$0xf]
        %v2716 = vld [vmem:[%s2710 + $0x14] sm:$0xf]
        %v2717 = vld [vmem:[%s2710 + $0x18] sm:$0xf]
        %v2718 = vld [vmem:[%s2710 + $0x1c] sm:$0xf]
        %v2719 = vld [vmem:[%s2710 + $0x20] sm:$0xf]
        %v2720 = vld [vmem:[%s2710 + $0x24] sm:$0xf]
        %v2721 = vld [vmem:[%s2710 + $0x28] sm:$0xf]
        %v2722 = vld [vmem:[%s2710 + $0x2c] sm:$0xf]
        %v2723 = vld [vmem:[%s2710 + $0x30] sm:$0xf]
        %v2724 = vld [vmem:[%s2710 + $0x34] sm:$0xf]
        %v2725 = vld [vmem:[%s2710 + $0x38] sm:$0xf]
        %v2726 = vld [vmem:[%s2710 + $0x3c] sm:$0xf]
        %v2743 = vunpack.c.l.b16 %v2711
        %v2744 = vunpack.c.l.b16 %v2712
        %v2745 = vunpack.c.l.b16 %v2713
        %v2746 = vunpack.c.l.b16 %v2714
        %v2747 = vunpack.c.l.b16 %v2715
        %v2748 = vunpack.c.l.b16 %v2716
        %v2749 = vunpack.c.l.b16 %v2717
        %v2750 = vunpack.c.l.b16 %v2718
        %v2751 = vunpack.c.l.b16 %v2719
        %v2752 = vunpack.c.l.b16 %v2720
        %v2753 = vunpack.c.l.b16 %v2721
        %v2754 = vunpack.c.l.b16 %v2722
        %v2755 = vunpack.c.l.b16 %v2723
        %v2756 = vunpack.c.l.b16 %v2724
        %v2757 = vunpack.c.l.b16 %v2725
        %v2758 = vunpack.c.l.b16 %v2726
        %v2759 = vpack.c.b16 %v2744, %v2743
        %v2760 = vpack.c.b16 %v2746, %v2745
        %v2761 = vpack.c.b16 %v2748, %v2747
        %v2762 = vpack.c.b16 %v2750, %v2749
        %v2763 = vpack.c.b16 %v2752, %v2751
        %v2764 = vpack.c.b16 %v2754, %v2753
        %v2765 = vpack.c.b16 %v2756, %v2755
        %v2766 = vpack.c.b16 %v2758, %v2757
        %2775 = vmatprep.subr.bf16.mxu0 0
        %2776 = vmatpush1.bf16.msra.mxu0 %v2766
        %2777 = vmatprep.subr.bf16.mxu0 0
        %2778 = vmatpush1.bf16.msra.mxu0 %v2765
        %2779 = vmatprep.subr.bf16.mxu0 0
        %2780 = vmatpush1.bf16.msra.mxu0 %v2764
        %2781 = vmatprep.subr.bf16.mxu0 0
        %2782 = vmatpush1.bf16.msra.mxu0 %v2763
        %2783 = vmatprep.subr.bf16.mxu0 0
        %2784 = vmatpush1.bf16.msra.mxu0 %v2762
        %2785 = vmatprep.subr.bf16.mxu0 0
        %2786 = vmatpush1.bf16.msra.mxu0 %v2761
        %2787 = vmatprep.subr.bf16.mxu0 0
        %2788 = vmatpush1.bf16.msra.mxu0 %v2760
        %2789 = vmatprep.subr.bf16.mxu0 0
        %2790 = vmatpush1.bf16.msra.mxu0 %v2759
        %2791 = vmatprep.subr.bf16.mxu0 0
        %2792 = vmatpush2.bf16.msra.mxu0 0
        %2793 = vmatprep.subr.bf16.mxu0 0
        %2794 = vmatpush2.bf16.msra.mxu0 0
        %2795 = vmatprep.subr.bf16.mxu0 0
        %2796 = vmatpush2.bf16.msra.mxu0 0
        %2797 = vmatprep.subr.bf16.mxu0 0
        %2798 = vmatpush2.bf16.msra.mxu0 0
        %2799 = vmatprep.subr.bf16.mxu0 0
        %2800 = vmatpush2.bf16.msra.mxu0 0
        %2801 = vmatprep.subr.bf16.mxu0 0
        %2802 = vmatpush2.bf16.msra.mxu0 0
        %2803 = vmatprep.subr.bf16.mxu0 0
        %2804 = vmatpush2.bf16.msra.mxu0 0
        %2805 = vmatprep.subr.bf16.mxu0 0
        %2806 = vmatpush2.bf16.msra.mxu0 0
        %2807 = vmatprep.mubr.bf16.mxu0 0
        %2808 = vmatmul.mubr.bf16.gmra.mxu0 %v1948
        %v2809 = vpop.f32.mrf.mxu0
        %v2810 = vadd.f32 0.0, %v2809
        %v2811 = vpop.f32.mrf.mxu0
        %v2812 = vpop.f32.mrf.mxu0
        %v2813 = vpop.f32.mrf.mxu0
        %2814 = vdwg.mxu0
        %v2815 = vmax.f32 %v2810, 0.0
        %v2816 = vmin.f32 %v2815, 1.0
        %s2817 = scalar_lea.vmem %s176, 56 [#allocation3]
        %2818 = vst [vmem:[%s2817] sm:$0xff] %v2816
        %s2819 = sand.u32 %s98, 1
        %s2820 = scalar_lea.sflag [#allocation4], %s2819
        %s2821 = sand.u32 %s98, 1
        %s2822 = smul.addr %s2821, 64
        %s2823 = scalar_lea.vmem [#allocation3], %s2822
        // Predicated region
        $region33: #{_cutouts_pallas.1} parent=31 // pred_check
          %p2824 = pneg %p108
        $region34: #{_cutouts_pallas.1} parent=31 // pred_check_branch
          %2826 = sbr.rel (%p2824) target = $region36
        $region35: #{_cutouts_pallas.1} parent=31 // pred_region
          %s2828 = ssub.s32 1024, 1024
          %2829 = vsyncadd %s2820, %s2828
          %s2830 = smul.addr %s17, 8
          %s2831 = smul.addr %s2830, 128
          %s2832 = scalar_lea.hbm %s3, %s2831
          %s2833 = sshll.u32 %s2823, 4
          %s2834 = int_to_ptr.vmem [resolvable:$true] %s2833
          %2839 = dma.vmem_to_hbm [thread:$0]  %s2834, 1024, %s2832, %s2820, 128, 128, 8
        $region36: #{_cutouts_pallas.1} parent=31 // pred_fallthru
          _
      $region32: #{_cutouts_pallas.1} parent=5 // pred_fallthru
        _
      %p2840 = scmp.le.s32.totalorder 2, %s12
      // Predicated region
      $region37: #{_cutouts_pallas.1} parent=5 // pred_check
        %p2841 = pneg %p2840
      $region38: #{_cutouts_pallas.1} parent=5 // pred_check_branch
        %2843 = sbr.rel (%p2841) target = $region40
      $region39: #{_cutouts_pallas.1} parent=5 // pred_region
        %s2844 = ssub.s32 %s12, 2
        // Predicated region
        $region41: #{_cutouts_pallas.1} parent=39 // pred_check
          %p2845 = pneg %p114
        $region42: #{_cutouts_pallas.1} parent=39 // pred_check_branch
          %2847 = sbr.rel (%p2845) target = $region44
        $region43: #{_cutouts_pallas.1} parent=39 // pred_region
          %s2848 = sand.u32 %s99, 1
          %s2849 = scalar_lea.sflag [#allocation4], %s2848
          %s2850 = sand.u32 %s99, 1
          %s2851 = smul.addr %s2850, 64
          %s2852 = scalar_lea.vmem [#allocation3], %s2851
          %2853 = dma.done %s2849, 1024
        $region44: #{_cutouts_pallas.1} parent=39 // pred_fallthru
          _
      $region40: #{_cutouts_pallas.1} parent=5 // pred_fallthru
        _
    $region6: #{_cutouts_pallas.1} parent=1 // loop_footer
      %s16 = sadd.s32 1, %s12
    $region7: #{_cutouts_pallas.1} parent=1 // loop_footer_branch
      %11 = sbr.rel target = $region3
    $region8: #{_cutouts_pallas.1} parent=1 // loop_exit
      _
    %2854 = vsyncpa [#allocation4], 1
    %s2855 = scalar_lea.sflag [#allocation4], 1
    %2856 = vsyncpa %s2855, 1

</llo_original>
